<compile_context>
chip_gen: v6e
topology: v6e:2x2x1
jax: 0.10.0
libtpu: 0.0.40
codegen_flags: <defaults>
</compile_context>

<pallas_src>
import functools

import jax
import jax.numpy as jnp
from jax.experimental import pallas as pl
from jax.experimental.pallas import tpu as pltpu


def _round_up(x, m):
    return (x + m - 1) // m * m


def _conv_taps(x_img, w_ref, K, Wp, r_pad):
    """acc[co, r] = sum_{kh,kw,ci} w[kh*K+kw, co, ci] * x_img[ci, r + kh*Wp + kw].

    x_img : (Cin8, S_pad)  channels on sublanes, flattened zero-padded pixels on lanes
    w_ref : (K*K, Cout8, Cin8) ref (resident across grid steps)
    returns (Cout8, r_pad) f32 accumulator -- lives in vregs/VMEM only, never hits HBM.
    """
    co8 = w_ref.shape[1]
    acc = jnp.zeros((co8, r_pad), jnp.float32)
    # K*K small accumulated MXU matmuls instead of an im2col lane-concatenate.  The lane
    # offsets are unaligned (XLU rotates), but both XLU and MXU have large slack here.
    for kh in range(K):
        for kw in range(K):
            off = kh * Wp + kw
            tap = x_img[:, off:off + r_pad]              # (Cin8, r_pad), static lane shift
            acc = acc + jnp.dot(w_ref[kh * K + kw], tap,
                                preferred_element_type=jnp.float32)
    return acc


def _stats_kernel(x_ref, w_ref, mask_ref, sum_ref, sq_ref, *, K, Wp):
    """Phase 1: per-block per-channel sum / sum-of-squares of the conv output.
    Only O(C) partials are written; the conv tile itself never leaves VMEM."""
    r_pad = mask_ref.shape[1]
    co8 = w_ref.shape[1]
    mask = mask_ref[...]                                  # (1, r_pad): 1.0 on valid positions
    s_tot = jnp.zeros((co8, 1), jnp.float32)
    q_tot = jnp.zeros((co8, 1), jnp.float32)
    for b in range(x_ref.shape[0]):
        acc = _conv_taps(x_ref[b], w_ref, K, Wp, r_pad)
        av = acc * mask                                   # zero out garbage columns / pad lanes
        s_tot = s_tot + jnp.sum(av, axis=1, keepdims=True)
        q_tot = q_tot + jnp.sum(av * acc, axis=1, keepdims=True)
    sum_ref[0] = s_tot
    sq_ref[0] = q_tot


def _conv_bn_relu_kernel(x_ref, w_ref, scale_ref, shift_ref, out_ref, *, K, Wp):
    """Phase 2: recompute the conv (cheaper than re-reading an HBM intermediate) and fuse the
    precomputed BN scale/shift + ReLU into the single full-size, lane-dense HBM write."""
    r_pad = out_ref.shape[2]
    scale = scale_ref[...]                                # (Cout8, 1), broadcast along lanes
    shift = shift_ref[...]
    for b in range(x_ref.shape[0]):
        acc = _conv_taps(x_ref[b], w_ref, K, Wp, r_pad)
        out_ref[b] = jnp.maximum(acc * scale + shift, 0.0).astype(out_ref.dtype)


def kconv_forward(x_nchw, weight_oihw, bias, gamma, beta, *, padding, eps=1e-5,
                  compute_dtype=jnp.float32, images_per_step=1):
    """PyTorch-equivalent forward: relu(batchnorm(conv(x))) with training-mode batch stats.

    compute_dtype   : dtype fed to the MXU. bf16 halves activation/weight HBM traffic on
                      v6e/v7x; element-wise work and accumulation always stay f32 (v5e-safe).
    images_per_step : images per grid step. 1 -> many parallel steps (v7x, 2 TCs);
                      >1 -> larger blocks amortizing per-step overhead (v5e/v6e, 1 TC).
    """
    N, Cin, H, W = x_nchw.shape
    Cout, _, K, _ = weight_oihw.shape
    assert N % images_per_step == 0
    B = images_per_step

    Hp, Wp = H + 2 * padding, W + 2 * padding
    Ho, Wo = Hp - K + 1, Wp - K + 1
    R = Ho * Wp                            # "extended" output positions incl. K-1 garbage cols/row
    R_pad = _round_up(R, 128)              # lane-dense output width
    CI8 = _round_up(Cin, 8)                # channels live on sublanes: pad to 8, NOT to 128
    CO8 = _round_up(Cout, 8)
    max_off = (K - 1) * Wp + (K - 1)
    S_pad = _round_up(max_off + R_pad, 128)   # flattened-pixel lane extent incl. slice overhang

    # ---- glue: NCHW -> (N, Cin8, flattened padded pixels).  No transpose: NCHW already has
    #      channels ahead of spatial, which is exactly the channels-on-sublanes layout we want.
    xp = jnp.pad(x_nchw.astype(jnp.float32),
                 ((0, 0), (0, CI8 - Cin), (padding, padding), (padding, padding)))
    x_flat = xp.reshape(N, CI8, Hp * Wp)
    x_flat = jnp.pad(x_flat, ((0, 0), (0, 0), (0, S_pad - Hp * Wp))).astype(compute_dtype)

    # ---- per-tap weights (K*K, Cout8, Cin8), zero-padded.
    w = jnp.pad(weight_oihw.astype(jnp.float32),
                ((0, CO8 - Cout), (0, CI8 - Cin), (0, 0), (0, 0)))
    w_taps = jnp.transpose(w, (2, 3, 0, 1)).reshape(K * K, CO8, CI8).astype(compute_dtype)

    # Conv bias is exactly cancelled by the training-mode BN mean subtraction -> dropped.
    del bias

    # Validity mask over extended lanes: index < R and (index mod Wp) < Wo.
    idx = jnp.arange(R_pad, dtype=jnp.int32)
    mask = jnp.logical_and(idx < R, idx % Wp < Wo).astype(jnp.float32).reshape(1, R_pad)

    n_blocks = N // B
    cparams = pltpu.CompilerParams(
        dimension_semantics=("parallel",),    # shard image blocks across TensorCores
        # Per-step blocks here are tens of KiB; raise toward ~100 MiB only if images_per_step
        # is cranked up on v5e/v6e (keep well under 64 MiB physical VMEM on v7x).
        vmem_limit_bytes=32 * 1024 * 1024)

    itemsize = jnp.dtype(compute_dtype).itemsize
    matmul_flops = 2 * N * K * K * CO8 * CI8 * R_pad
    x_bytes = N * CI8 * S_pad * itemsize
    w_bytes = K * K * CO8 * CI8 * itemsize
    ce_stats = pl.CostEstimate(
        flops=int(matmul_flops + 4 * N * CO8 * R_pad), transcendentals=0,
        bytes_accessed=int(x_bytes + n_blocks * w_bytes + 4 * R_pad + 2 * n_blocks * CO8 * 4))
    ce_out = pl.CostEstimate(
        flops=int(matmul_flops + 3 * N * CO8 * R_pad), transcendentals=0,
        bytes_accessed=int(x_bytes + n_blocks * w_bytes + 2 * CO8 * 4 + N * CO8 * R_pad * 4))

    # ---- phase 1: conv recomputed in VMEM, only O(C) per-channel partial stats written.
    sums, sqs = pl.pallas_call(
        functools.partial(_stats_kernel, K=K, Wp=Wp),
        grid=(n_blocks,),
        in_specs=[
            pl.BlockSpec((B, CI8, S_pad), lambda i: (i, 0, 0)),
            pl.BlockSpec((K * K, CO8, CI8), lambda i: (0, 0, 0)),   # resident across steps
            pl.BlockSpec((1, R_pad), lambda i: (0, 0)),             # resident across steps
        ],
        out_specs=[
            pl.BlockSpec((1, CO8, 1), lambda i: (i, 0, 0)),
            pl.BlockSpec((1, CO8, 1), lambda i: (i, 0, 0)),
        ],
        out_shape=[
            jax.ShapeDtypeStruct((n_blocks, CO8, 1), jnp.float32),
            jax.ShapeDtypeStruct((n_blocks, CO8, 1), jnp.float32),
        ],
        compiler_params=cparams,
        cost_estimate=ce_stats,
    )(x_flat, w_taps, mask)

    # ---- tiny O(C) glue: reduce partials, derive BN scale/shift once (hoisted out of kernel).
    count = float(N * Ho * Wo)
    mean = jnp.sum(sums, axis=0) / count                              # (CO8, 1)
    # Single-pass E[x^2]-E[x]^2 in f32 (clamped). NOTE: can lose precision if |mean| >> std;
    # switch to a shifted two-pass / Welford combine if tolerances tighten.
    var = jnp.maximum(jnp.sum(sqs, axis=0) / count - mean * mean, 0.0)
    gamma_p = jnp.pad(gamma.astype(jnp.float32), (0, CO8 - Cout)).reshape(CO8, 1)
    beta_p = jnp.pad(beta.astype(jnp.float32), (0, CO8 - Cout)).reshape(CO8, 1)
    # Invariant: weight/gamma/beta padding is zero, so padded channels get scale=shift=0
    # (var=0 -> rsqrt(eps) finite) and come out of ReLU as exact zeros.
    scale = gamma_p * jax.lax.rsqrt(var + eps)
    shift = beta_p - mean * scale

    # ---- phase 2: recompute conv, fuse scale/shift + ReLU, single lane-dense output write.
    out_flat = pl.pallas_call(
        functools.partial(_conv_bn_relu_kernel, K=K, Wp=Wp),
        grid=(n_blocks,),
        in_specs=[
            pl.BlockSpec((B, CI8, S_pad), lambda i: (i, 0, 0)),
            pl.BlockSpec((K * K, CO8, CI8), lambda i: (0, 0, 0)),
            pl.BlockSpec((CO8, 1), lambda i: (0, 0)),
            pl.BlockSpec((CO8, 1), lambda i: (0, 0)),
        ],
        out_specs=pl.BlockSpec((B, CO8, R_pad), lambda i: (i, 0, 0)),
        out_shape=jax.ShapeDtypeStruct((N, CO8, R_pad), jnp.float32),
        compiler_params=cparams,
        cost_estimate=ce_out,
    )(x_flat, w_taps, scale, shift)

    # ---- glue: output is already in NCHW order; drop channel padding + the K-1 garbage
    #      columns per row with slices/reshape only -- no transpose pass.
    return out_flat[:, :Cout, :R].reshape(N, Cout, Ho, Wp)[:, :, :, :Wo]


def _reference(x, w, b, gamma, beta, *, padding, eps=1e-5):
    y = jax.lax.conv_general_dilated(
        x, w, window_strides=(1, 1),
        padding=[(padding, padding), (padding, padding)],
        dimension_numbers=('NCHW', 'OIHW', 'NCHW'))
    y = y + b.reshape(1, -1, 1, 1)
    mean = jnp.mean(y, axis=(0, 2, 3), keepdims=True)
    var = jnp.mean((y - mean) ** 2, axis=(0, 2, 3), keepdims=True)
    y = (y - mean) * jax.lax.rsqrt(var + eps) * gamma.reshape(1, -1, 1, 1) \
        + beta.reshape(1, -1, 1, 1)
    return jnp.maximum(y, 0.0)


if __name__ == "__main__":
    # Small shapes consistent with the module: kconv(n_in=4, n_out=8, ksize=3, padding=1)
    N, Cin, Cout, H, W, K, P = 2, 4, 8, 16, 16, 3, 1

    key = jax.random.PRNGKey(0)
    kx, kw_, kb, kg, kbeta = jax.random.split(key, 5)
    x = jax.random.normal(kx, (N, Cin, H, W), jnp.float32)
    weight = jax.random.normal(kw_, (Cout, Cin, K, K), jnp.float32) * 0.1   # OIHW
    bias = jax.random.normal(kb, (Cout,), jnp.float32) * 0.1                # conv bias
    gamma = 1.0 + 0.1 * jax.random.normal(kg, (Cout,), jnp.float32)         # BN weight
    beta = 0.1 * jax.random.normal(kbeta, (Cout,), jnp.float32)             # BN bias

    ref = _reference(x, weight, bias, gamma, beta, padding=P)

    # f32 MXU path, one image per grid step (v7x-style: many parallel steps).
    out_f32 = jax.block_until_ready(
        kconv_forward(x, weight, bias, gamma, beta, padding=P,
                      compute_dtype=jnp.float32, images_per_step=1))
    assert out_f32.shape == (N, Cout, H, W)
    err_f32 = float(jnp.max(jnp.abs(out_f32 - ref)))
    assert jnp.allclose(out_f32, ref, rtol=1e-2, atol=1e-2), \
        f"f32 mismatch vs reference (max |err|={err_f32})"

    # bf16 MXU-input path, two images per grid step (v5e/v6e-style: bigger blocks).
    out_bf16 = jax.block_until_ready(
        kconv_forward(x, weight, bias, gamma, beta, padding=P,
                      compute_dtype=jnp.bfloat16, images_per_step=2))
    assert out_bf16.shape == (N, Cout, H, W)
    err_bf16 = float(jnp.max(jnp.abs(out_bf16 - ref)))
    assert jnp.allclose(out_bf16, ref, rtol=5e-2, atol=5e-2), \
        f"bf16 mismatch vs reference (max |err|={err_bf16})"

    print("KERNEL_OK")
</pallas_src>

<mosaic_0001>
module attributes {stable_mosaic.version = 11 : i64} {
  func.func @_stats_kernel(%arg0: i32, %arg1: memref<1x8x512xf32, #tpu.memory_space<vmem>>, %arg2: memref<9x8x8xf32, #tpu.memory_space<vmem>>, %arg3: memref<1x384xf32, #tpu.memory_space<vmem>>, %arg4: memref<1x8x1xf32, #tpu.memory_space<vmem>>, %arg5: memref<1x8x1xf32, #tpu.memory_space<vmem>>) attributes {dimension_semantics = [#tpu.dimension_semantics<parallel>], iteration_bounds = array<i64: 2>, scalar_prefetch = 0 : i64, scratch_operands = 0 : i64, tpu.core_type = #tpu.core_type<tc>, window_params = [{transform_indices = @transform_0, window_bounds = array<i64: 1, 8, 512>}, {pipeline_mode = #tpu.pipeline_mode<synchronous>, transform_indices = @transform_1, window_bounds = array<i64: 9, 8, 8>}, {pipeline_mode = #tpu.pipeline_mode<synchronous>, transform_indices = @transform_2, window_bounds = array<i64: 1, 384>}, {transform_indices = @transform_3, window_bounds = array<i64: 1, 8, 1>}, {transform_indices = @transform_4, window_bounds = array<i64: 1, 8, 1>}]} {
    %c0 = arith.constant 0 : index
    %c0_0 = arith.constant 0 : index
    %0 = vector.load %arg3[%c0, %c0_0] : memref<1x384xf32, #tpu.memory_space<vmem>>, vector<1x384xf32>
    %cst = arith.constant 0.000000e+00 : f32
    %1 = vector.broadcast %cst : f32 to vector<8x1xf32>
    %cst_1 = arith.constant 0.000000e+00 : f32
    %2 = vector.broadcast %cst_1 : f32 to vector<8x1xf32>
    %c0_2 = arith.constant 0 : index
    %c0_3 = arith.constant 0 : index
    %c0_4 = arith.constant 0 : index
    %3 = vector.load %arg1[%c0_2, %c0_3, %c0_4] : memref<1x8x512xf32, #tpu.memory_space<vmem>>, vector<1x8x512xf32>
    %4 = vector.shape_cast %3 : vector<1x8x512xf32> to vector<8x512xf32>
    %cst_5 = arith.constant 0.000000e+00 : f32
    %5 = vector.broadcast %cst_5 : f32 to vector<8x384xf32>
    %6 = vector.extract_strided_slice %4 {offsets = [0, 0], sizes = [8, 384], strides = [1, 1]} : vector<8x512xf32> to vector<8x384xf32>
    %c0_6 = arith.constant 0 : index
    %c0_7 = arith.constant 0 : index
    %c0_8 = arith.constant 0 : index
    %7 = vector.load %arg2[%c0_6, %c0_7, %c0_8] : memref<9x8x8xf32, #tpu.memory_space<vmem>>, vector<1x8x8xf32>
    %8 = vector.shape_cast %7 : vector<1x8x8xf32> to vector<8x8xf32>
    %cst_9 = arith.constant dense<0.000000e+00> : vector<8x384xf32>
    %9 = tpu.matmul %8, %6, %cst_9 {dimension_numbers = #tpu.dot_dimension_numbers<[1], [0], [0], [1], [0, 0, 1, 1], [], []>} : vector<8x8xf32>, vector<8x384xf32>, vector<8x384xf32> -> vector<8x384xf32>
    %10 = arith.addf %5, %9 : vector<8x384xf32>
    %11 = vector.extract_strided_slice %4 {offsets = [0, 1], sizes = [8, 384], strides = [1, 1]} : vector<8x512xf32> to vector<8x384xf32>
    %c1 = arith.constant 1 : index
    %c0_10 = arith.constant 0 : index
    %c0_11 = arith.constant 0 : index
    %12 = vector.load %arg2[%c1, %c0_10, %c0_11] : memref<9x8x8xf32, #tpu.memory_space<vmem>>, vector<1x8x8xf32>
    %13 = vector.shape_cast %12 : vector<1x8x8xf32> to vector<8x8xf32>
    %cst_12 = arith.constant dense<0.000000e+00> : vector<8x384xf32>
    %14 = tpu.matmul %13, %11, %cst_12 {dimension_numbers = #tpu.dot_dimension_numbers<[1], [0], [0], [1], [0, 0, 1, 1], [], []>} : vector<8x8xf32>, vector<8x384xf32>, vector<8x384xf32> -> vector<8x384xf32>
    %15 = arith.addf %10, %14 : vector<8x384xf32>
    %16 = vector.extract_strided_slice %4 {offsets = [0, 2], sizes = [8, 384], strides = [1, 1]} : vector<8x512xf32> to vector<8x384xf32>
    %c2 = arith.constant 2 : index
    %c0_13 = arith.constant 0 : index
    %c0_14 = arith.constant 0 : index
    %17 = vector.load %arg2[%c2, %c0_13, %c0_14] : memref<9x8x8xf32, #tpu.memory_space<vmem>>, vector<1x8x8xf32>
    %18 = vector.shape_cast %17 : vector<1x8x8xf32> to vector<8x8xf32>
    %cst_15 = arith.constant dense<0.000000e+00> : vector<8x384xf32>
    %19 = tpu.matmul %18, %16, %cst_15 {dimension_numbers = #tpu.dot_dimension_numbers<[1], [0], [0], [1], [0, 0, 1, 1], [], []>} : vector<8x8xf32>, vector<8x384xf32>, vector<8x384xf32> -> vector<8x384xf32>
    %20 = arith.addf %15, %19 : vector<8x384xf32>
    %21 = vector.extract_strided_slice %4 {offsets = [0, 18], sizes = [8, 384], strides = [1, 1]} : vector<8x512xf32> to vector<8x384xf32>
    %c3 = arith.constant 3 : index
    %c0_16 = arith.constant 0 : index
    %c0_17 = arith.constant 0 : index
    %22 = vector.load %arg2[%c3, %c0_16, %c0_17] : memref<9x8x8xf32, #tpu.memory_space<vmem>>, vector<1x8x8xf32>
    %23 = vector.shape_cast %22 : vector<1x8x8xf32> to vector<8x8xf32>
    %cst_18 = arith.constant dense<0.000000e+00> : vector<8x384xf32>
    %24 = tpu.matmul %23, %21, %cst_18 {dimension_numbers = #tpu.dot_dimension_numbers<[1], [0], [0], [1], [0, 0, 1, 1], [], []>} : vector<8x8xf32>, vector<8x384xf32>, vector<8x384xf32> -> vector<8x384xf32>
    %25 = arith.addf %20, %24 : vector<8x384xf32>
    %26 = vector.extract_strided_slice %4 {offsets = [0, 19], sizes = [8, 384], strides = [1, 1]} : vector<8x512xf32> to vector<8x384xf32>
    %c4 = arith.constant 4 : index
    %c0_19 = arith.constant 0 : index
    %c0_20 = arith.constant 0 : index
    %27 = vector.load %arg2[%c4, %c0_19, %c0_20] : memref<9x8x8xf32, #tpu.memory_space<vmem>>, vector<1x8x8xf32>
    %28 = vector.shape_cast %27 : vector<1x8x8xf32> to vector<8x8xf32>
    %cst_21 = arith.constant dense<0.000000e+00> : vector<8x384xf32>
    %29 = tpu.matmul %28, %26, %cst_21 {dimension_numbers = #tpu.dot_dimension_numbers<[1], [0], [0], [1], [0, 0, 1, 1], [], []>} : vector<8x8xf32>, vector<8x384xf32>, vector<8x384xf32> -> vector<8x384xf32>
    %30 = arith.addf %25, %29 : vector<8x384xf32>
    %31 = vector.extract_strided_slice %4 {offsets = [0, 20], sizes = [8, 384], strides = [1, 1]} : vector<8x512xf32> to vector<8x384xf32>
    %c5 = arith.constant 5 : index
    %c0_22 = arith.constant 0 : index
    %c0_23 = arith.constant 0 : index
    %32 = vector.load %arg2[%c5, %c0_22, %c0_23] : memref<9x8x8xf32, #tpu.memory_space<vmem>>, vector<1x8x8xf32>
    %33 = vector.shape_cast %32 : vector<1x8x8xf32> to vector<8x8xf32>
    %cst_24 = arith.constant dense<0.000000e+00> : vector<8x384xf32>
    %34 = tpu.matmul %33, %31, %cst_24 {dimension_numbers = #tpu.dot_dimension_numbers<[1], [0], [0], [1], [0, 0, 1, 1], [], []>} : vector<8x8xf32>, vector<8x384xf32>, vector<8x384xf32> -> vector<8x384xf32>
    %35 = arith.addf %30, %34 : vector<8x384xf32>
    %36 = vector.extract_strided_slice %4 {offsets = [0, 36], sizes = [8, 384], strides = [1, 1]} : vector<8x512xf32> to vector<8x384xf32>
    %c6 = arith.constant 6 : index
    %c0_25 = arith.constant 0 : index
    %c0_26 = arith.constant 0 : index
    %37 = vector.load %arg2[%c6, %c0_25, %c0_26] : memref<9x8x8xf32, #tpu.memory_space<vmem>>, vector<1x8x8xf32>
    %38 = vector.shape_cast %37 : vector<1x8x8xf32> to vector<8x8xf32>
    %cst_27 = arith.constant dense<0.000000e+00> : vector<8x384xf32>
    %39 = tpu.matmul %38, %36, %cst_27 {dimension_numbers = #tpu.dot_dimension_numbers<[1], [0], [0], [1], [0, 0, 1, 1], [], []>} : vector<8x8xf32>, vector<8x384xf32>, vector<8x384xf32> -> vector<8x384xf32>
    %40 = arith.addf %35, %39 : vector<8x384xf32>
    %41 = vector.extract_strided_slice %4 {offsets = [0, 37], sizes = [8, 384], strides = [1, 1]} : vector<8x512xf32> to vector<8x384xf32>
    %c7 = arith.constant 7 : index
    %c0_28 = arith.constant 0 : index
    %c0_29 = arith.constant 0 : index
    %42 = vector.load %arg2[%c7, %c0_28, %c0_29] : memref<9x8x8xf32, #tpu.memory_space<vmem>>, vector<1x8x8xf32>
    %43 = vector.shape_cast %42 : vector<1x8x8xf32> to vector<8x8xf32>
    %cst_30 = arith.constant dense<0.000000e+00> : vector<8x384xf32>
    %44 = tpu.matmul %43, %41, %cst_30 {dimension_numbers = #tpu.dot_dimension_numbers<[1], [0], [0], [1], [0, 0, 1, 1], [], []>} : vector<8x8xf32>, vector<8x384xf32>, vector<8x384xf32> -> vector<8x384xf32>
    %45 = arith.addf %40, %44 : vector<8x384xf32>
    %46 = vector.extract_strided_slice %4 {offsets = [0, 38], sizes = [8, 384], strides = [1, 1]} : vector<8x512xf32> to vector<8x384xf32>
    %c8 = arith.constant 8 : index
    %c0_31 = arith.constant 0 : index
    %c0_32 = arith.constant 0 : index
    %47 = vector.load %arg2[%c8, %c0_31, %c0_32] : memref<9x8x8xf32, #tpu.memory_space<vmem>>, vector<1x8x8xf32>
    %48 = vector.shape_cast %47 : vector<1x8x8xf32> to vector<8x8xf32>
    %cst_33 = arith.constant dense<0.000000e+00> : vector<8x384xf32>
    %49 = tpu.matmul %48, %46, %cst_33 {dimension_numbers = #tpu.dot_dimension_numbers<[1], [0], [0], [1], [0, 0, 1, 1], [], []>} : vector<8x8xf32>, vector<8x384xf32>, vector<8x384xf32> -> vector<8x384xf32>
    %50 = arith.addf %45, %49 : vector<8x384xf32>
    %51 = vector.broadcast %0 : vector<1x384xf32> to vector<8x384xf32>
    %52 = arith.mulf %50, %51 : vector<8x384xf32>
    %cst_34 = arith.constant dense<0.000000e+00> : vector<8xf32>
    %53 = vector.multi_reduction <add>, %52, %cst_34 [1] : vector<8x384xf32> to vector<8xf32>
    %54 = vector.shape_cast %53 : vector<8xf32> to vector<8x1xf32>
    %55 = arith.addf %1, %54 : vector<8x1xf32>
    %56 = arith.mulf %52, %50 : vector<8x384xf32>
    %cst_35 = arith.constant dense<0.000000e+00> : vector<8xf32>
    %57 = vector.multi_reduction <add>, %56, %cst_35 [1] : vector<8x384xf32> to vector<8xf32>
    %58 = vector.shape_cast %57 : vector<8xf32> to vector<8x1xf32>
    %59 = arith.addf %2, %58 : vector<8x1xf32>
    %c0_36 = arith.constant 0 : index
    %c0_37 = arith.constant 0 : index
    %c0_38 = arith.constant 0 : index
    %60 = vector.load %arg4[%c0_36, %c0_37, %c0_38] : memref<1x8x1xf32, #tpu.memory_space<vmem>>, vector<1x8x1xf32>
    %61 = vector.shape_cast %60 : vector<1x8x1xf32> to vector<8x1xf32>
    %62 = vector.shape_cast %55 : vector<8x1xf32> to vector<1x8x1xf32>
    tpu.vector_store %arg4[%c0_36, %c0_37, %c0_38], %62 {strides = array<i32>} : memref<1x8x1xf32, #tpu.memory_space<vmem>>, vector<1x8x1xf32>,
    %c0_39 = arith.constant 0 : index
    %c0_40 = arith.constant 0 : index
    %c0_41 = arith.constant 0 : index
    %63 = vector.load %arg5[%c0_39, %c0_40, %c0_41] : memref<1x8x1xf32, #tpu.memory_space<vmem>>, vector<1x8x1xf32>
    %64 = vector.shape_cast %63 : vector<1x8x1xf32> to vector<8x1xf32>
    %65 = vector.shape_cast %59 : vector<8x1xf32> to vector<1x8x1xf32>
    tpu.vector_store %arg5[%c0_39, %c0_40, %c0_41], %65 {strides = array<i32>} : memref<1x8x1xf32, #tpu.memory_space<vmem>>, vector<1x8x1xf32>,
    return
  }
  func.func @transform_0(%arg0: i32) -> (i32, i32, i32) {
    %c0_i32 = arith.constant 0 : i32
    %c0_i32_0 = arith.constant 0 : i32
    %c0_i32_1 = arith.constant 0 : i32
    return %arg0, %c0_i32, %c0_i32_0 : i32, i32, i32
  }
  func.func @transform_1(%arg0: i32) -> (i32, i32, i32) {
    %c0_i32 = arith.constant 0 : i32
    %c0_i32_0 = arith.constant 0 : i32
    %c0_i32_1 = arith.constant 0 : i32
    %c0_i32_2 = arith.constant 0 : i32
    return %c0_i32, %c0_i32_0, %c0_i32_1 : i32, i32, i32
  }
  func.func @transform_2(%arg0: i32) -> (i32, i32) {
    %c0_i32 = arith.constant 0 : i32
    %c0_i32_0 = arith.constant 0 : i32
    %c0_i32_1 = arith.constant 0 : i32
    return %c0_i32, %c0_i32_0 : i32, i32
  }
  func.func @transform_3(%arg0: i32) -> (i32, i32, i32) {
    %c0_i32 = arith.constant 0 : i32
    %c0_i32_0 = arith.constant 0 : i32
    %c0_i32_1 = arith.constant 0 : i32
    return %arg0, %c0_i32, %c0_i32_0 : i32, i32, i32
  }
  func.func @transform_4(%arg0: i32) -> (i32, i32, i32) {
    %c0_i32 = arith.constant 0 : i32
    %c0_i32_0 = arith.constant 0 : i32
    %c0_i32_1 = arith.constant 0 : i32
    return %arg0, %c0_i32, %c0_i32_0 : i32, i32, i32
  }
}

</mosaic_0001>

<llo_original>
// kernel: tpu_custom_call.1
$region0: #{tpu_custom_call.1}
  #allocation0 [shape = 'u32[]', space=smem, size = 0x4, offset = 0x4, fixed_abs, tag = 'smem constant byte address 0x4 - core index']
  #allocation1 [shape = 'u32[144,128]{1,0:T(1,128)}', space=vmem, size = 0x12000, scoped, tag = 'internal scratch']
  %s0 = inlined_call_operand.vmem [shape: f32[2,8,512], index: 0, kind: input, shape index: {}]
  %s1 = inlined_call_operand.vmem [shape: f32[9,8,8], index: 1, kind: input, shape index: {}]
  %s2 = inlined_call_operand.vmem [shape: f32[1,384], index: 2, kind: input, shape index: {}]
  %s3 = inlined_call_operand.vmem [shape: f32[2,8,1], index: 3, kind: output, shape index: {0}]
  %s4 = inlined_call_operand.vmem [shape: f32[2,8,1], index: 4, kind: output, shape index: {1}]
  %5 = xla_tuple %s3, %s4
  %s6 = sld [smem:[#allocation0]]
  $region53: #{tpu_custom_call.1} parent=0
    _
  %s8 = ssub.s32 1, %s6
  %s9 = scalar_select 0, %s8, %s6
  loop: start=0, step=1, limit=4
  $region2: #{tpu_custom_call.1} parent=0 // loop_pre_header
    _
  $region3: #{tpu_custom_call.1} parent=0 // loop_header
    %s11 = sphi 0, %s15
    %p12 = scmp.ge.s32.totalorder %s11, 4
    %s21 = sphi 0, %s23
    %s24 = sphi 0, %s21
    %s25 = sphi 0, %s24
    %s41 = sphi 0, %s25
    %s45 = sphi 0, %s45
    %s47 = sphi 0, %s45
    %s48 = sphi 0, %s47
    %s62 = sphi 0, %s48
    %s66 = sphi 0, %s66
    %s68 = sphi 0, %s66
    %s69 = sphi 0, %s68
    %s83 = sphi 0, %s69
    %s89 = sphi 0, %s91
    %s92 = sphi 0, %s89
    %s93 = sphi 0, %s92
    %s109 = sphi 0, %s93
    %s115 = sphi 0, %s117
    %s118 = sphi 0, %s115
    %s119 = sphi 0, %s118
    %s135 = sphi 0, %s119
  $region4: #{tpu_custom_call.1} parent=0 // loop_header_branch
    %14 = sbr.rel (%p12) target = $region8
  $region5: #{tpu_custom_call.1} parent=0 // loop_body
    %s16 = ssub.s32 %s11, 1
    %s17 = ssub.s32 %s11, 2
    %s18 = sadd.s32 %s11, 1
    %s19 = ssub.s32 %s11, %s18
    %p20 = scmp.eq.s32.totalorder %s19, 0
    %s22 = sadd.s32 %s21, 1
    %s23 = scalar_select %p20, %s21, %s22
    %p26 = pneg %p20
    %p27 = scmp.eq.s32.totalorder %s11, 1
    %p28 = por %p26, %p27
    %p29 = scmp.ne.s32.totalorder %s21, %s24
    %p30 = scmp.eq.s32.totalorder %s11, 0
    %p31 = por %p29, %p30
    %p32 = scmp.ne.s32.totalorder %s21, %s24
    %p33 = scmp.eq.s32.totalorder %s16, 1
    %p34 = por %p32, %p33
    %p35 = scmp.ne.s32.totalorder %s24, %s25
    %p36 = scmp.eq.s32.totalorder %s16, 0
    %p37 = por %p35, %p36
    %p38 = scmp.ne.s32.totalorder %s24, %s25
    %p39 = scmp.eq.s32.totalorder %s17, 1
    %p40 = por %p38, %p39
    %p42 = scmp.ne.s32.totalorder %s25, %s41
    %p43 = scmp.eq.s32.totalorder %s17, 0
    %p44 = por %p42, %p43
    %s46 = sadd.s32 %s45, 1
    %p49 = scmp.eq.s32.totalorder %s11, 1
    %p50 = scmp.ne.s32.totalorder %s45, %s47
    %p51 = scmp.eq.s32.totalorder %s11, 0
    %p52 = por %p50, %p51
    %p53 = scmp.ne.s32.totalorder %s45, %s47
    %p54 = scmp.eq.s32.totalorder %s16, 1
    %p55 = por %p53, %p54
    %p56 = scmp.ne.s32.totalorder %s47, %s48
    %p57 = scmp.eq.s32.totalorder %s16, 0
    %p58 = por %p56, %p57
    %p59 = scmp.ne.s32.totalorder %s47, %s48
    %p60 = scmp.eq.s32.totalorder %s17, 1
    %p61 = por %p59, %p60
    %p63 = scmp.ne.s32.totalorder %s48, %s62
    %p64 = scmp.eq.s32.totalorder %s17, 0
    %p65 = por %p63, %p64
    %s67 = sadd.s32 %s66, 1
    %p70 = scmp.eq.s32.totalorder %s11, 1
    %p71 = scmp.ne.s32.totalorder %s66, %s68
    %p72 = scmp.eq.s32.totalorder %s11, 0
    %p73 = por %p71, %p72
    %p74 = scmp.ne.s32.totalorder %s66, %s68
    %p75 = scmp.eq.s32.totalorder %s16, 1
    %p76 = por %p74, %p75
    %p77 = scmp.ne.s32.totalorder %s68, %s69
    %p78 = scmp.eq.s32.totalorder %s16, 0
    %p79 = por %p77, %p78
    %p80 = scmp.ne.s32.totalorder %s68, %s69
    %p81 = scmp.eq.s32.totalorder %s17, 1
    %p82 = por %p80, %p81
    %p84 = scmp.ne.s32.totalorder %s69, %s83
    %p85 = scmp.eq.s32.totalorder %s17, 0
    %p86 = por %p84, %p85
    %s87 = ssub.s32 %s11, %s18
    %p88 = scmp.eq.s32.totalorder %s87, 0
    %s90 = sadd.s32 %s89, 1
    %s91 = scalar_select %p88, %s89, %s90
    %p94 = pneg %p88
    %p95 = scmp.eq.s32.totalorder %s11, 1
    %p96 = por %p94, %p95
    %p97 = scmp.ne.s32.totalorder %s89, %s92
    %p98 = scmp.eq.s32.totalorder %s11, 0
    %p99 = por %p97, %p98
    %p100 = scmp.ne.s32.totalorder %s89, %s92
    %p101 = scmp.eq.s32.totalorder %s16, 1
    %p102 = por %p100, %p101
    %p103 = scmp.ne.s32.totalorder %s92, %s93
    %p104 = scmp.eq.s32.totalorder %s16, 0
    %p105 = por %p103, %p104
    %p106 = scmp.ne.s32.totalorder %s92, %s93
    %p107 = scmp.eq.s32.totalorder %s17, 1
    %p108 = por %p106, %p107
    %p110 = scmp.ne.s32.totalorder %s93, %s109
    %p111 = scmp.eq.s32.totalorder %s17, 0
    %p112 = por %p110, %p111
    %s113 = ssub.s32 %s11, %s18
    %p114 = scmp.eq.s32.totalorder %s113, 0
    %s116 = sadd.s32 %s115, 1
    %s117 = scalar_select %p114, %s115, %s116
    %p120 = pneg %p114
    %p121 = scmp.eq.s32.totalorder %s11, 1
    %p122 = por %p120, %p121
    %p123 = scmp.ne.s32.totalorder %s115, %s118
    %p124 = scmp.eq.s32.totalorder %s11, 0
    %p125 = por %p123, %p124
    %p126 = scmp.ne.s32.totalorder %s115, %s118
    %p127 = scmp.eq.s32.totalorder %s16, 1
    %p128 = por %p126, %p127
    %p129 = scmp.ne.s32.totalorder %s118, %s119
    %p130 = scmp.eq.s32.totalorder %s16, 0
    %p131 = por %p129, %p130
    %p132 = scmp.ne.s32.totalorder %s118, %s119
    %p133 = scmp.eq.s32.totalorder %s17, 1
    %p134 = por %p132, %p133
    %p136 = scmp.ne.s32.totalorder %s119, %s135
    %p137 = scmp.eq.s32.totalorder %s17, 0
    %p138 = por %p136, %p137
    %p139 = scmp.le.s32.totalorder 1, %s11
    %p140 = scmp.lt.s32.totalorder %s11, 3
    %p141 = pnand %p139, %p140
    %p142 = pneg %p141
    // Predicated region
    $region9: #{tpu_custom_call.1} parent=5 // pred_check
      _
    $region10: #{tpu_custom_call.1} parent=5 // pred_check_branch
      %144 = sbr.rel (%p141) target = $region12
    $region11: #{tpu_custom_call.1} parent=5 // pred_region
      %s145 = ssub.s32 %s11, 1
      // Predicated region
      $region13: #{tpu_custom_call.1} parent=11 // pred_check
        %p146 = pneg %p58
      $region14: #{tpu_custom_call.1} parent=11 // pred_check_branch
        %148 = sbr.rel (%p146) target = $region16
      $region15: #{tpu_custom_call.1} parent=11 // pred_region
        _
      $region16: #{tpu_custom_call.1} parent=11 // pred_fallthru
        _
      // Predicated region
      $region17: #{tpu_custom_call.1} parent=11 // pred_check
        %p149 = pneg %p79
      $region18: #{tpu_custom_call.1} parent=11 // pred_check_branch
        %151 = sbr.rel (%p149) target = $region20
      $region19: #{tpu_custom_call.1} parent=11 // pred_region
        _
      $region20: #{tpu_custom_call.1} parent=11 // pred_fallthru
        _
    $region12: #{tpu_custom_call.1} parent=5 // pred_fallthru
      _
    %p152 = scmp.lt.s32.totalorder %s11, 2
    // Predicated region
    $region21: #{tpu_custom_call.1} parent=5 // pred_check
      %p153 = pneg %p152
    $region22: #{tpu_custom_call.1} parent=5 // pred_check_branch
      %155 = sbr.rel (%p153) target = $region24
    $region23: #{tpu_custom_call.1} parent=5 // pred_region
      // Predicated region
      $region25: #{tpu_custom_call.1} parent=23 // pred_check
        %p156 = pneg %p31
      $region26: #{tpu_custom_call.1} parent=23 // pred_check_branch
        %158 = sbr.rel (%p156) target = $region28
      $region27: #{tpu_custom_call.1} parent=23 // pred_region
        %p159 = scmp.lt.s32.totalorder %s11, 1
        %s160 = scalar_select %p159, %s11, 1
        %s161 = smul.addr %s160, 4
        %s162 = smul.addr %s161, 8
        %s163 = scalar_lea.vmem %s0, %s162
      $region28: #{tpu_custom_call.1} parent=23 // pred_fallthru
        _
    $region24: #{tpu_custom_call.1} parent=5 // pred_fallthru
      _
    %p164 = scmp.le.s32.totalorder 1, %s11
    %p165 = scmp.lt.s32.totalorder %s11, 3
    %p166 = pnand %p164, %p165
    %p167 = pneg %p166
    // Predicated region
    $region29: #{tpu_custom_call.1} parent=5 // pred_check
      _
    $region30: #{tpu_custom_call.1} parent=5 // pred_check_branch
      %169 = sbr.rel (%p166) target = $region32
    $region31: #{tpu_custom_call.1} parent=5 // pred_region
      %s170 = ssub.s32 %s11, 1
      %p171 = scmp.lt.s32.totalorder %s16, 1
      %s172 = scalar_select %p171, %s16, 1
      %s173 = smul.addr %s172, 4
      %s174 = smul.addr %s173, 8
      %s175 = scalar_lea.vmem %s0, %s174
      %p176 = pneg %p37
      %p177 = pneg %p34
      %p178 = pneg %p58
      %p179 = pneg %p55
      %p180 = pneg %p79
      %p181 = pneg %p76
      %p182 = pneg %p105
      %p183 = pneg %p102
      %p184 = scmp.lt.s32.totalorder %s16, 1
      %s185 = scalar_select %p184, %s16, 1
      %s186 = smul.addr %s185, 8
      %s187 = scalar_lea.vmem %s3, %s186
      %p188 = pneg %p131
      %p189 = pneg %p128
      %p190 = scmp.lt.s32.totalorder %s16, 1
      %s191 = scalar_select %p190, %s16, 1
      %s192 = smul.addr %s191, 8
      %s193 = scalar_lea.vmem %s4, %s192
      %p194 = scmp.lt.s32.totalorder %s16, 1
      %s195 = scalar_select %p194, %s16, 1
      %s196 = smul.addr %s195, 4
      %s197 = smul.addr %s196, 8
      %s198 = scalar_lea.vmem %s0, %s197
      %p199 = scmp.lt.s32.totalorder %s16, 1
      %s200 = scalar_select %p199, %s16, 1
      %s201 = smul.addr %s200, 8
      %s202 = scalar_lea.vmem %s3, %s201
      %p203 = scmp.lt.s32.totalorder %s16, 1
      %s204 = scalar_select %p203, %s16, 1
      %s205 = smul.addr %s204, 8
      %s206 = scalar_lea.vmem %s4, %s205
      %v207 = vld [vmem:[%s2] sm:$0x7]
      %v208 = vld [vmem:[%s198] sm:$0xff]
      %v209 = vld [vmem:[%s198 + $0x8] sm:$0xff]
      %v210 = vld [vmem:[%s198 + $0x10] sm:$0xff]
      %v211 = vld [vmem:[%s198 + $0x18] sm:$0xff]
      %v212 = vld [vmem:[%s1] sm:$0xff]
      %s213 = scalar_lea.vmem %s1, 8
      %v214 = vld [vmem:[%s213] sm:$0xff]
      %219 = vrot.lane.b32.xlu0 %v208, 127
      %v220 = vpop.permute.xlu0 %219
      %221 = vrot.lane.b32.xlu0 %v209, 127
      %v222 = vpop.permute.xlu0 %221
      %223 = vrot.lane.b32.xlu0 %v210, 127
      %v224 = vpop.permute.xlu0 %223
      %225 = vrot.lane.b32.xlu0 %v211, 127
      %v226 = vpop.permute.xlu0 %225
      %vm227 = vcmask 1039360
      %v228 = vsel %vm227, %v220, %v222
      %v229 = vsel %vm227, %v222, %v224
      %v230 = vsel %vm227, %v224, %v226
      %vm234 = vcmask 64512
      %v236 = vsel %vm234, %v214, 0
      %238 = vmatprep.subr.mxu0 0.0
      %239 = vmatpush1.msra.mxu0 0.0
      %240 = vmatprep.subr.mxu0 0.0
      %241 = vmatpush1.msra.mxu0 0.0
      %242 = vmatprep.subr.mxu0 0.0
      %243 = vmatpush1.msra.mxu0 0.0
      %244 = vmatprep.subr.mxu0 0.0
      %245 = vmatpush1.msra.mxu0 0.0
      %246 = vmatprep.subr.mxu0 0.0
      %247 = vmatpush1.msra.mxu0 0.0
      %248 = vmatprep.subr.mxu0 0.0
      %249 = vmatpush1.msra.mxu0 0.0
      %250 = vmatprep.subr.mxu0 0.0
      %251 = vmatpush1.msra.mxu0 0.0
      %252 = vmatprep.subr.mxu0 0.0
      %253 = vmatpush1.msra.mxu0 0.0
      %254 = vmatprep.subr.mxu0 0.0
      %255 = vmatpush1.msra.mxu0 0.0
      %256 = vmatprep.subr.mxu0 0.0
      %257 = vmatpush1.msra.mxu0 0.0
      %258 = vmatprep.subr.mxu0 0.0
      %259 = vmatpush1.msra.mxu0 0.0
      %260 = vmatprep.subr.mxu0 0.0
      %261 = vmatpush1.msra.mxu0 0.0
      %262 = vmatprep.subr.mxu0 0.0
      %263 = vmatpush1.msra.mxu0 0.0
      %264 = vmatprep.subr.mxu0 0.0
      %265 = vmatpush1.msra.mxu0 0.0
      %266 = vmatprep.subr.mxu0 0.0
      %267 = vmatpush1.msra.mxu0 0.0
      %268 = vmatprep.subr.mxu0 %v229
      %269 = vmatpush1.msra.mxu0 %v228
      %270 = vmatprep.subr.mxu0 0.0
      %271 = vmatpush2.msra.mxu0 0.0
      %272 = vmatprep.subr.mxu0 0.0
      %273 = vmatpush2.msra.mxu0 0.0
      %274 = vmatprep.subr.mxu0 0.0
      %275 = vmatpush2.msra.mxu0 0.0
      %276 = vmatprep.subr.mxu0 0.0
      %277 = vmatpush2.msra.mxu0 0.0
      %278 = vmatprep.subr.mxu0 0.0
      %279 = vmatpush2.msra.mxu0 0.0
      %280 = vmatprep.subr.mxu0 0.0
      %281 = vmatpush2.msra.mxu0 0.0
      %282 = vmatprep.subr.mxu0 0.0
      %283 = vmatpush2.msra.mxu0 0.0
      %284 = vmatprep.subr.mxu0 0.0
      %285 = vmatpush2.msra.mxu0 0.0
      %286 = vmatprep.subr.mxu0 0.0
      %287 = vmatpush2.msra.mxu0 0.0
      %288 = vmatprep.subr.mxu0 0.0
      %289 = vmatpush2.msra.mxu0 0.0
      %290 = vmatprep.subr.mxu0 0.0
      %291 = vmatpush2.msra.mxu0 0.0
      %292 = vmatprep.subr.mxu0 0.0
      %293 = vmatpush2.msra.mxu0 0.0
      %294 = vmatprep.subr.mxu0 0.0
      %295 = vmatpush2.msra.mxu0 0.0
      %296 = vmatprep.subr.mxu0 0.0
      %297 = vmatpush2.msra.mxu0 0.0
      %298 = vmatprep.subr.mxu0 0.0
      %299 = vmatpush2.msra.mxu0 0.0
      %300 = vmatprep.subr.mxu0 0.0
      %301 = vmatpush2.msra.mxu0 0.0
      %302 = vmatprep.mubr.f32.mxu0 0.0
      %303 = vmatmul.mubr.f32.gmra.mxu0 %v236
      %v304 = vpop.f32.mrf.mxu0
      %v305 = vadd.f32 0.0, %v304
      %v306 = vpop.f32.mrf.mxu0
      %v307 = vadd.f32 0.0, %v306
      %308 = vdwg.mxu0
      %309 = vmatprep.subr.mxu0 0.0
      %310 = vmatpush1.msra.mxu0 0.0
      %311 = vmatprep.subr.mxu0 0.0
      %312 = vmatpush1.msra.mxu0 0.0
      %313 = vmatprep.subr.mxu0 0.0
      %314 = vmatpush1.msra.mxu0 0.0
      %315 = vmatprep.subr.mxu0 0.0
      %316 = vmatpush1.msra.mxu0 0.0
      %317 = vmatprep.subr.mxu0 0.0
      %318 = vmatpush1.msra.mxu0 0.0
      %319 = vmatprep.subr.mxu0 0.0
      %320 = vmatpush1.msra.mxu0 0.0
      %321 = vmatprep.subr.mxu0 0.0
      %322 = vmatpush1.msra.mxu0 0.0
      %323 = vmatprep.subr.mxu0 0.0
      %324 = vmatpush1.msra.mxu0 0.0
      %325 = vmatprep.subr.mxu0 0.0
      %326 = vmatpush1.msra.mxu0 0.0
      %327 = vmatprep.subr.mxu0 0.0
      %328 = vmatpush1.msra.mxu0 0.0
      %329 = vmatprep.subr.mxu0 0.0
      %330 = vmatpush1.msra.mxu0 0.0
      %331 = vmatprep.subr.mxu0 0.0
      %332 = vmatpush1.msra.mxu0 0.0
      %333 = vmatprep.subr.mxu0 0.0
      %334 = vmatpush1.msra.mxu0 0.0
      %335 = vmatprep.subr.mxu0 0.0
      %336 = vmatpush1.msra.mxu0 0.0
      %337 = vmatprep.subr.mxu0 0.0
      %338 = vmatpush1.msra.mxu0 0.0
      %339 = vmatprep.subr.mxu0 0.0
      %340 = vmatpush1.msra.mxu0 %v230
      %341 = vmatprep.subr.mxu0 0.0
      %342 = vmatpush2.msra.mxu0 0.0
      %343 = vmatprep.subr.mxu0 0.0
      %344 = vmatpush2.msra.mxu0 0.0
      %345 = vmatprep.subr.mxu0 0.0
      %346 = vmatpush2.msra.mxu0 0.0
      %347 = vmatprep.subr.mxu0 0.0
      %348 = vmatpush2.msra.mxu0 0.0
      %349 = vmatprep.subr.mxu0 0.0
      %350 = vmatpush2.msra.mxu0 0.0
      %351 = vmatprep.subr.mxu0 0.0
      %352 = vmatpush2.msra.mxu0 0.0
      %353 = vmatprep.subr.mxu0 0.0
      %354 = vmatpush2.msra.mxu0 0.0
      %355 = vmatprep.subr.mxu0 0.0
      %356 = vmatpush2.msra.mxu0 0.0
      %357 = vmatprep.subr.mxu0 0.0
      %358 = vmatpush2.msra.mxu0 0.0
      %359 = vmatprep.subr.mxu0 0.0
      %360 = vmatpush2.msra.mxu0 0.0
      %361 = vmatprep.subr.mxu0 0.0
      %362 = vmatpush2.msra.mxu0 0.0
      %363 = vmatprep.subr.mxu0 0.0
      %364 = vmatpush2.msra.mxu0 0.0
      %365 = vmatprep.subr.mxu0 0.0
      %366 = vmatpush2.msra.mxu0 0.0
      %367 = vmatprep.subr.mxu0 0.0
      %368 = vmatpush2.msra.mxu0 0.0
      %369 = vmatprep.subr.mxu0 0.0
      %370 = vmatpush2.msra.mxu0 0.0
      %371 = vmatprep.subr.mxu0 0.0
      %372 = vmatpush2.msra.mxu0 0.0
      %373 = vmatprep.mubr.f32.mxu0 0.0
      %374 = vmatmul.mubr.f32.gmra.mxu0 %v236
      %v375 = vpop.f32.mrf.mxu0
      %v376 = vadd.f32 0.0, %v375
      %v377 = vpop.f32.mrf.mxu0
      %378 = vdwg.mxu0
      %v380 = vsel %vm234, %v212, 0
      %382 = vmatprep.subr.mxu0 0.0
      %383 = vmatpush1.msra.mxu0 0.0
      %384 = vmatprep.subr.mxu0 0.0
      %385 = vmatpush1.msra.mxu0 0.0
      %386 = vmatprep.subr.mxu0 0.0
      %387 = vmatpush1.msra.mxu0 0.0
      %388 = vmatprep.subr.mxu0 0.0
      %389 = vmatpush1.msra.mxu0 0.0
      %390 = vmatprep.subr.mxu0 0.0
      %391 = vmatpush1.msra.mxu0 0.0
      %392 = vmatprep.subr.mxu0 0.0
      %393 = vmatpush1.msra.mxu0 0.0
      %394 = vmatprep.subr.mxu0 0.0
      %395 = vmatpush1.msra.mxu0 0.0
      %396 = vmatprep.subr.mxu0 0.0
      %397 = vmatpush1.msra.mxu0 0.0
      %398 = vmatprep.subr.mxu0 0.0
      %399 = vmatpush1.msra.mxu0 0.0
      %400 = vmatprep.subr.mxu0 0.0
      %401 = vmatpush1.msra.mxu0 0.0
      %402 = vmatprep.subr.mxu0 0.0
      %403 = vmatpush1.msra.mxu0 0.0
      %404 = vmatprep.subr.mxu0 0.0
      %405 = vmatpush1.msra.mxu0 0.0
      %406 = vmatprep.subr.mxu0 0.0
      %407 = vmatpush1.msra.mxu0 0.0
      %408 = vmatprep.subr.mxu0 0.0
      %409 = vmatpush1.msra.mxu0 0.0
      %410 = vmatprep.subr.mxu0 0.0
      %411 = vmatpush1.msra.mxu0 0.0
      %412 = vmatprep.subr.mxu0 %v209
      %413 = vmatpush1.msra.mxu0 %v208
      %414 = vmatprep.subr.mxu0 0.0
      %415 = vmatpush2.msra.mxu0 0.0
      %416 = vmatprep.subr.mxu0 0.0
      %417 = vmatpush2.msra.mxu0 0.0
      %418 = vmatprep.subr.mxu0 0.0
      %419 = vmatpush2.msra.mxu0 0.0
      %420 = vmatprep.subr.mxu0 0.0
      %421 = vmatpush2.msra.mxu0 0.0
      %422 = vmatprep.subr.mxu0 0.0
      %423 = vmatpush2.msra.mxu0 0.0
      %424 = vmatprep.subr.mxu0 0.0
      %425 = vmatpush2.msra.mxu0 0.0
      %426 = vmatprep.subr.mxu0 0.0
      %427 = vmatpush2.msra.mxu0 0.0
      %428 = vmatprep.subr.mxu0 0.0
      %429 = vmatpush2.msra.mxu0 0.0
      %430 = vmatprep.subr.mxu0 0.0
      %431 = vmatpush2.msra.mxu0 0.0
      %432 = vmatprep.subr.mxu0 0.0
      %433 = vmatpush2.msra.mxu0 0.0
      %434 = vmatprep.subr.mxu0 0.0
      %435 = vmatpush2.msra.mxu0 0.0
      %436 = vmatprep.subr.mxu0 0.0
      %437 = vmatpush2.msra.mxu0 0.0
      %438 = vmatprep.subr.mxu0 0.0
      %439 = vmatpush2.msra.mxu0 0.0
      %440 = vmatprep.subr.mxu0 0.0
      %441 = vmatpush2.msra.mxu0 0.0
      %442 = vmatprep.subr.mxu0 0.0
      %443 = vmatpush2.msra.mxu0 0.0
      %444 = vmatprep.subr.mxu0 0.0
      %445 = vmatpush2.msra.mxu0 0.0
      %446 = vmatprep.mubr.f32.mxu0 0.0
      %447 = vmatmul.mubr.f32.gmra.mxu0 %v380
      %v448 = vpop.f32.mrf.mxu0
      %v449 = vadd.f32 %v305, %v448
      %v450 = vpop.f32.mrf.mxu0
      %v451 = vadd.f32 %v307, %v450
      %452 = vdwg.mxu0
      %453 = vmatprep.subr.mxu0 0.0
      %454 = vmatpush1.msra.mxu0 0.0
      %455 = vmatprep.subr.mxu0 0.0
      %456 = vmatpush1.msra.mxu0 0.0
      %457 = vmatprep.subr.mxu0 0.0
      %458 = vmatpush1.msra.mxu0 0.0
      %459 = vmatprep.subr.mxu0 0.0
      %460 = vmatpush1.msra.mxu0 0.0
      %461 = vmatprep.subr.mxu0 0.0
      %462 = vmatpush1.msra.mxu0 0.0
      %463 = vmatprep.subr.mxu0 0.0
      %464 = vmatpush1.msra.mxu0 0.0
      %465 = vmatprep.subr.mxu0 0.0
      %466 = vmatpush1.msra.mxu0 0.0
      %467 = vmatprep.subr.mxu0 0.0
      %468 = vmatpush1.msra.mxu0 0.0
      %469 = vmatprep.subr.mxu0 0.0
      %470 = vmatpush1.msra.mxu0 0.0
      %471 = vmatprep.subr.mxu0 0.0
      %472 = vmatpush1.msra.mxu0 0.0
      %473 = vmatprep.subr.mxu0 0.0
      %474 = vmatpush1.msra.mxu0 0.0
      %475 = vmatprep.subr.mxu0 0.0
      %476 = vmatpush1.msra.mxu0 0.0
      %477 = vmatprep.subr.mxu0 0.0
      %478 = vmatpush1.msra.mxu0 0.0
      %479 = vmatprep.subr.mxu0 0.0
      %480 = vmatpush1.msra.mxu0 0.0
      %481 = vmatprep.subr.mxu0 0.0
      %482 = vmatpush1.msra.mxu0 0.0
      %483 = vmatprep.subr.mxu0 0.0
      %484 = vmatpush1.msra.mxu0 %v210
      %485 = vmatprep.subr.mxu0 0.0
      %486 = vmatpush2.msra.mxu0 0.0
      %487 = vmatprep.subr.mxu0 0.0
      %488 = vmatpush2.msra.mxu0 0.0
      %489 = vmatprep.subr.mxu0 0.0
      %490 = vmatpush2.msra.mxu0 0.0
      %491 = vmatprep.subr.mxu0 0.0
      %492 = vmatpush2.msra.mxu0 0.0
      %493 = vmatprep.subr.mxu0 0.0
      %494 = vmatpush2.msra.mxu0 0.0
      %495 = vmatprep.subr.mxu0 0.0
      %496 = vmatpush2.msra.mxu0 0.0
      %497 = vmatprep.subr.mxu0 0.0
      %498 = vmatpush2.msra.mxu0 0.0
      %499 = vmatprep.subr.mxu0 0.0
      %500 = vmatpush2.msra.mxu0 0.0
      %501 = vmatprep.subr.mxu0 0.0
      %502 = vmatpush2.msra.mxu0 0.0
      %503 = vmatprep.subr.mxu0 0.0
      %504 = vmatpush2.msra.mxu0 0.0
      %505 = vmatprep.subr.mxu0 0.0
      %506 = vmatpush2.msra.mxu0 0.0
      %507 = vmatprep.subr.mxu0 0.0
      %508 = vmatpush2.msra.mxu0 0.0
      %509 = vmatprep.subr.mxu0 0.0
      %510 = vmatpush2.msra.mxu0 0.0
      %511 = vmatprep.subr.mxu0 0.0
      %512 = vmatpush2.msra.mxu0 0.0
      %513 = vmatprep.subr.mxu0 0.0
      %514 = vmatpush2.msra.mxu0 0.0
      %515 = vmatprep.subr.mxu0 0.0
      %516 = vmatpush2.msra.mxu0 0.0
      %517 = vmatprep.mubr.f32.mxu0 0.0
      %518 = vmatmul.mubr.f32.gmra.mxu0 %v380
      %v519 = vpop.f32.mrf.mxu0
      %v520 = vadd.f32 %v376, %v519
      %v521 = vpop.f32.mrf.mxu0
      %522 = vdwg.mxu0
      %s523 = scalar_lea.vmem %s1, 16
      %v524 = vld [vmem:[%s523] sm:$0xff]
      %525 = vrot.lane.b32.xlu0 %v208, 126
      %v526 = vpop.permute.xlu0 %525
      %527 = vrot.lane.b32.xlu0 %v209, 126
      %v528 = vpop.permute.xlu0 %527
      %529 = vrot.lane.b32.xlu0 %v210, 126
      %v530 = vpop.permute.xlu0 %529
      %531 = vrot.lane.b32.xlu0 %v211, 126
      %v532 = vpop.permute.xlu0 %531
      %vm533 = vcmask 1031168
      %v534 = vsel %vm533, %v526, %v528
      %v535 = vsel %vm533, %v528, %v530
      %v536 = vsel %vm533, %v530, %v532
      %v541 = vsel %vm234, %v524, 0
      %543 = vmatprep.subr.mxu0 0.0
      %544 = vmatpush1.msra.mxu0 0.0
      %545 = vmatprep.subr.mxu0 0.0
      %546 = vmatpush1.msra.mxu0 0.0
      %547 = vmatprep.subr.mxu0 0.0
      %548 = vmatpush1.msra.mxu0 0.0
      %549 = vmatprep.subr.mxu0 0.0
      %550 = vmatpush1.msra.mxu0 0.0
      %551 = vmatprep.subr.mxu0 0.0
      %552 = vmatpush1.msra.mxu0 0.0
      %553 = vmatprep.subr.mxu0 0.0
      %554 = vmatpush1.msra.mxu0 0.0
      %555 = vmatprep.subr.mxu0 0.0
      %556 = vmatpush1.msra.mxu0 0.0
      %557 = vmatprep.subr.mxu0 0.0
      %558 = vmatpush1.msra.mxu0 0.0
      %559 = vmatprep.subr.mxu0 0.0
      %560 = vmatpush1.msra.mxu0 0.0
      %561 = vmatprep.subr.mxu0 0.0
      %562 = vmatpush1.msra.mxu0 0.0
      %563 = vmatprep.subr.mxu0 0.0
      %564 = vmatpush1.msra.mxu0 0.0
      %565 = vmatprep.subr.mxu0 0.0
      %566 = vmatpush1.msra.mxu0 0.0
      %567 = vmatprep.subr.mxu0 0.0
      %568 = vmatpush1.msra.mxu0 0.0
      %569 = vmatprep.subr.mxu0 0.0
      %570 = vmatpush1.msra.mxu0 0.0
      %571 = vmatprep.subr.mxu0 0.0
      %572 = vmatpush1.msra.mxu0 0.0
      %573 = vmatprep.subr.mxu0 %v535
      %574 = vmatpush1.msra.mxu0 %v534
      %575 = vmatprep.subr.mxu0 0.0
      %576 = vmatpush2.msra.mxu0 0.0
      %577 = vmatprep.subr.mxu0 0.0
      %578 = vmatpush2.msra.mxu0 0.0
      %579 = vmatprep.subr.mxu0 0.0
      %580 = vmatpush2.msra.mxu0 0.0
      %581 = vmatprep.subr.mxu0 0.0
      %582 = vmatpush2.msra.mxu0 0.0
      %583 = vmatprep.subr.mxu0 0.0
      %584 = vmatpush2.msra.mxu0 0.0
      %585 = vmatprep.subr.mxu0 0.0
      %586 = vmatpush2.msra.mxu0 0.0
      %587 = vmatprep.subr.mxu0 0.0
      %588 = vmatpush2.msra.mxu0 0.0
      %589 = vmatprep.subr.mxu0 0.0
      %590 = vmatpush2.msra.mxu0 0.0
      %591 = vmatprep.subr.mxu0 0.0
      %592 = vmatpush2.msra.mxu0 0.0
      %593 = vmatprep.subr.mxu0 0.0
      %594 = vmatpush2.msra.mxu0 0.0
      %595 = vmatprep.subr.mxu0 0.0
      %596 = vmatpush2.msra.mxu0 0.0
      %597 = vmatprep.subr.mxu0 0.0
      %598 = vmatpush2.msra.mxu0 0.0
      %599 = vmatprep.subr.mxu0 0.0
      %600 = vmatpush2.msra.mxu0 0.0
      %601 = vmatprep.subr.mxu0 0.0
      %602 = vmatpush2.msra.mxu0 0.0
      %603 = vmatprep.subr.mxu0 0.0
      %604 = vmatpush2.msra.mxu0 0.0
      %605 = vmatprep.subr.mxu0 0.0
      %606 = vmatpush2.msra.mxu0 0.0
      %607 = vmatprep.mubr.f32.mxu0 0.0
      %608 = vmatmul.mubr.f32.gmra.mxu0 %v541
      %v609 = vpop.f32.mrf.mxu0
      %v610 = vadd.f32 0.0, %v609
      %v611 = vpop.f32.mrf.mxu0
      %v612 = vadd.f32 0.0, %v611
      %613 = vdwg.mxu0
      %614 = vmatprep.subr.mxu0 0.0
      %615 = vmatpush1.msra.mxu0 0.0
      %616 = vmatprep.subr.mxu0 0.0
      %617 = vmatpush1.msra.mxu0 0.0
      %618 = vmatprep.subr.mxu0 0.0
      %619 = vmatpush1.msra.mxu0 0.0
      %620 = vmatprep.subr.mxu0 0.0
      %621 = vmatpush1.msra.mxu0 0.0
      %622 = vmatprep.subr.mxu0 0.0
      %623 = vmatpush1.msra.mxu0 0.0
      %624 = vmatprep.subr.mxu0 0.0
      %625 = vmatpush1.msra.mxu0 0.0
      %626 = vmatprep.subr.mxu0 0.0
      %627 = vmatpush1.msra.mxu0 0.0
      %628 = vmatprep.subr.mxu0 0.0
      %629 = vmatpush1.msra.mxu0 0.0
      %630 = vmatprep.subr.mxu0 0.0
      %631 = vmatpush1.msra.mxu0 0.0
      %632 = vmatprep.subr.mxu0 0.0
      %633 = vmatpush1.msra.mxu0 0.0
      %634 = vmatprep.subr.mxu0 0.0
      %635 = vmatpush1.msra.mxu0 0.0
      %636 = vmatprep.subr.mxu0 0.0
      %637 = vmatpush1.msra.mxu0 0.0
      %638 = vmatprep.subr.mxu0 0.0
      %639 = vmatpush1.msra.mxu0 0.0
      %640 = vmatprep.subr.mxu0 0.0
      %641 = vmatpush1.msra.mxu0 0.0
      %642 = vmatprep.subr.mxu0 0.0
      %643 = vmatpush1.msra.mxu0 0.0
      %644 = vmatprep.subr.mxu0 0.0
      %645 = vmatpush1.msra.mxu0 %v536
      %646 = vmatprep.subr.mxu0 0.0
      %647 = vmatpush2.msra.mxu0 0.0
      %648 = vmatprep.subr.mxu0 0.0
      %649 = vmatpush2.msra.mxu0 0.0
      %650 = vmatprep.subr.mxu0 0.0
      %651 = vmatpush2.msra.mxu0 0.0
      %652 = vmatprep.subr.mxu0 0.0
      %653 = vmatpush2.msra.mxu0 0.0
      %654 = vmatprep.subr.mxu0 0.0
      %655 = vmatpush2.msra.mxu0 0.0
      %656 = vmatprep.subr.mxu0 0.0
      %657 = vmatpush2.msra.mxu0 0.0
      %658 = vmatprep.subr.mxu0 0.0
      %659 = vmatpush2.msra.mxu0 0.0
      %660 = vmatprep.subr.mxu0 0.0
      %661 = vmatpush2.msra.mxu0 0.0
      %662 = vmatprep.subr.mxu0 0.0
      %663 = vmatpush2.msra.mxu0 0.0
      %664 = vmatprep.subr.mxu0 0.0
      %665 = vmatpush2.msra.mxu0 0.0
      %666 = vmatprep.subr.mxu0 0.0
      %667 = vmatpush2.msra.mxu0 0.0
      %668 = vmatprep.subr.mxu0 0.0
      %669 = vmatpush2.msra.mxu0 0.0
      %670 = vmatprep.subr.mxu0 0.0
      %671 = vmatpush2.msra.mxu0 0.0
      %672 = vmatprep.subr.mxu0 0.0
      %673 = vmatpush2.msra.mxu0 0.0
      %674 = vmatprep.subr.mxu0 0.0
      %675 = vmatpush2.msra.mxu0 0.0
      %676 = vmatprep.subr.mxu0 0.0
      %677 = vmatpush2.msra.mxu0 0.0
      %678 = vmatprep.mubr.f32.mxu0 0.0
      %679 = vmatmul.mubr.f32.gmra.mxu0 %v541
      %v680 = vpop.f32.mrf.mxu0
      %v681 = vadd.f32 0.0, %v680
      %v682 = vpop.f32.mrf.mxu0
      %683 = vdwg.mxu0
      %v684 = vadd.f32 %v449, %v610
      %v685 = vadd.f32 %v451, %v612
      %v686 = vadd.f32 %v520, %v681
      %s687 = scalar_lea.vmem %s1, 24
      %v688 = vld [vmem:[%s687] sm:$0xff]
      %689 = vrot.lane.b32.xlu0 %v208, 110
      %v690 = vpop.permute.xlu0 %689
      %691 = vrot.lane.b32.xlu0 %v209, 110
      %v692 = vpop.permute.xlu0 %691
      %693 = vrot.lane.b32.xlu0 %v210, 110
      %v694 = vpop.permute.xlu0 %693
      %695 = vrot.lane.b32.xlu0 %v211, 110
      %v696 = vpop.permute.xlu0 %695
      %vm697 = vcmask 900096
      %v698 = vsel %vm697, %v690, %v692
      %v699 = vsel %vm697, %v692, %v694
      %v700 = vsel %vm697, %v694, %v696
      %v705 = vsel %vm234, %v688, 0
      %707 = vmatprep.subr.mxu0 0.0
      %708 = vmatpush1.msra.mxu0 0.0
      %709 = vmatprep.subr.mxu0 0.0
      %710 = vmatpush1.msra.mxu0 0.0
      %711 = vmatprep.subr.mxu0 0.0
      %712 = vmatpush1.msra.mxu0 0.0
      %713 = vmatprep.subr.mxu0 0.0
      %714 = vmatpush1.msra.mxu0 0.0
      %715 = vmatprep.subr.mxu0 0.0
      %716 = vmatpush1.msra.mxu0 0.0
      %717 = vmatprep.subr.mxu0 0.0
      %718 = vmatpush1.msra.mxu0 0.0
      %719 = vmatprep.subr.mxu0 0.0
      %720 = vmatpush1.msra.mxu0 0.0
      %721 = vmatprep.subr.mxu0 0.0
      %722 = vmatpush1.msra.mxu0 0.0
      %723 = vmatprep.subr.mxu0 0.0
      %724 = vmatpush1.msra.mxu0 0.0
      %725 = vmatprep.subr.mxu0 0.0
      %726 = vmatpush1.msra.mxu0 0.0
      %727 = vmatprep.subr.mxu0 0.0
      %728 = vmatpush1.msra.mxu0 0.0
      %729 = vmatprep.subr.mxu0 0.0
      %730 = vmatpush1.msra.mxu0 0.0
      %731 = vmatprep.subr.mxu0 0.0
      %732 = vmatpush1.msra.mxu0 0.0
      %733 = vmatprep.subr.mxu0 0.0
      %734 = vmatpush1.msra.mxu0 0.0
      %735 = vmatprep.subr.mxu0 0.0
      %736 = vmatpush1.msra.mxu0 0.0
      %737 = vmatprep.subr.mxu0 %v699
      %738 = vmatpush1.msra.mxu0 %v698
      %739 = vmatprep.subr.mxu0 0.0
      %740 = vmatpush2.msra.mxu0 0.0
      %741 = vmatprep.subr.mxu0 0.0
      %742 = vmatpush2.msra.mxu0 0.0
      %743 = vmatprep.subr.mxu0 0.0
      %744 = vmatpush2.msra.mxu0 0.0
      %745 = vmatprep.subr.mxu0 0.0
      %746 = vmatpush2.msra.mxu0 0.0
      %747 = vmatprep.subr.mxu0 0.0
      %748 = vmatpush2.msra.mxu0 0.0
      %749 = vmatprep.subr.mxu0 0.0
      %750 = vmatpush2.msra.mxu0 0.0
      %751 = vmatprep.subr.mxu0 0.0
      %752 = vmatpush2.msra.mxu0 0.0
      %753 = vmatprep.subr.mxu0 0.0
      %754 = vmatpush2.msra.mxu0 0.0
      %755 = vmatprep.subr.mxu0 0.0
      %756 = vmatpush2.msra.mxu0 0.0
      %757 = vmatprep.subr.mxu0 0.0
      %758 = vmatpush2.msra.mxu0 0.0
      %759 = vmatprep.subr.mxu0 0.0
      %760 = vmatpush2.msra.mxu0 0.0
      %761 = vmatprep.subr.mxu0 0.0
      %762 = vmatpush2.msra.mxu0 0.0
      %763 = vmatprep.subr.mxu0 0.0
      %764 = vmatpush2.msra.mxu0 0.0
      %765 = vmatprep.subr.mxu0 0.0
      %766 = vmatpush2.msra.mxu0 0.0
      %767 = vmatprep.subr.mxu0 0.0
      %768 = vmatpush2.msra.mxu0 0.0
      %769 = vmatprep.subr.mxu0 0.0
      %770 = vmatpush2.msra.mxu0 0.0
      %771 = vmatprep.mubr.f32.mxu0 0.0
      %772 = vmatmul.mubr.f32.gmra.mxu0 %v705
      %v773 = vpop.f32.mrf.mxu0
      %v774 = vadd.f32 0.0, %v773
      %v775 = vpop.f32.mrf.mxu0
      %v776 = vadd.f32 0.0, %v775
      %777 = vdwg.mxu0
      %778 = vmatprep.subr.mxu0 0.0
      %779 = vmatpush1.msra.mxu0 0.0
      %780 = vmatprep.subr.mxu0 0.0
      %781 = vmatpush1.msra.mxu0 0.0
      %782 = vmatprep.subr.mxu0 0.0
      %783 = vmatpush1.msra.mxu0 0.0
      %784 = vmatprep.subr.mxu0 0.0
      %785 = vmatpush1.msra.mxu0 0.0
      %786 = vmatprep.subr.mxu0 0.0
      %787 = vmatpush1.msra.mxu0 0.0
      %788 = vmatprep.subr.mxu0 0.0
      %789 = vmatpush1.msra.mxu0 0.0
      %790 = vmatprep.subr.mxu0 0.0
      %791 = vmatpush1.msra.mxu0 0.0
      %792 = vmatprep.subr.mxu0 0.0
      %793 = vmatpush1.msra.mxu0 0.0
      %794 = vmatprep.subr.mxu0 0.0
      %795 = vmatpush1.msra.mxu0 0.0
      %796 = vmatprep.subr.mxu0 0.0
      %797 = vmatpush1.msra.mxu0 0.0
      %798 = vmatprep.subr.mxu0 0.0
      %799 = vmatpush1.msra.mxu0 0.0
      %800 = vmatprep.subr.mxu0 0.0
      %801 = vmatpush1.msra.mxu0 0.0
      %802 = vmatprep.subr.mxu0 0.0
      %803 = vmatpush1.msra.mxu0 0.0
      %804 = vmatprep.subr.mxu0 0.0
      %805 = vmatpush1.msra.mxu0 0.0
      %806 = vmatprep.subr.mxu0 0.0
      %807 = vmatpush1.msra.mxu0 0.0
      %808 = vmatprep.subr.mxu0 0.0
      %809 = vmatpush1.msra.mxu0 %v700
      %810 = vmatprep.subr.mxu0 0.0
      %811 = vmatpush2.msra.mxu0 0.0
      %812 = vmatprep.subr.mxu0 0.0
      %813 = vmatpush2.msra.mxu0 0.0
      %814 = vmatprep.subr.mxu0 0.0
      %815 = vmatpush2.msra.mxu0 0.0
      %816 = vmatprep.subr.mxu0 0.0
      %817 = vmatpush2.msra.mxu0 0.0
      %818 = vmatprep.subr.mxu0 0.0
      %819 = vmatpush2.msra.mxu0 0.0
      %820 = vmatprep.subr.mxu0 0.0
      %821 = vmatpush2.msra.mxu0 0.0
      %822 = vmatprep.subr.mxu0 0.0
      %823 = vmatpush2.msra.mxu0 0.0
      %824 = vmatprep.subr.mxu0 0.0
      %825 = vmatpush2.msra.mxu0 0.0
      %826 = vmatprep.subr.mxu0 0.0
      %827 = vmatpush2.msra.mxu0 0.0
      %828 = vmatprep.subr.mxu0 0.0
      %829 = vmatpush2.msra.mxu0 0.0
      %830 = vmatprep.subr.mxu0 0.0
      %831 = vmatpush2.msra.mxu0 0.0
      %832 = vmatprep.subr.mxu0 0.0
      %833 = vmatpush2.msra.mxu0 0.0
      %834 = vmatprep.subr.mxu0 0.0
      %835 = vmatpush2.msra.mxu0 0.0
      %836 = vmatprep.subr.mxu0 0.0
      %837 = vmatpush2.msra.mxu0 0.0
      %838 = vmatprep.subr.mxu0 0.0
      %839 = vmatpush2.msra.mxu0 0.0
      %840 = vmatprep.subr.mxu0 0.0
      %841 = vmatpush2.msra.mxu0 0.0
      %842 = vmatprep.mubr.f32.mxu0 0.0
      %843 = vmatmul.mubr.f32.gmra.mxu0 %v705
      %v844 = vpop.f32.mrf.mxu0
      %v845 = vadd.f32 0.0, %v844
      %v846 = vpop.f32.mrf.mxu0
      %847 = vdwg.mxu0
      %v848 = vadd.f32 %v684, %v774
      %v849 = vadd.f32 %v685, %v776
      %v850 = vadd.f32 %v686, %v845
      %s851 = scalar_lea.vmem %s1, 32
      %v852 = vld [vmem:[%s851] sm:$0xff]
      %853 = vrot.lane.b32.xlu0 %v208, 109
      %v854 = vpop.permute.xlu0 %853
      %855 = vrot.lane.b32.xlu0 %v209, 109
      %v856 = vpop.permute.xlu0 %855
      %857 = vrot.lane.b32.xlu0 %v210, 109
      %v858 = vpop.permute.xlu0 %857
      %859 = vrot.lane.b32.xlu0 %v211, 109
      %v860 = vpop.permute.xlu0 %859
      %vm861 = vcmask 891904
      %v862 = vsel %vm861, %v854, %v856
      %v863 = vsel %vm861, %v856, %v858
      %v864 = vsel %vm861, %v858, %v860
      %v869 = vsel %vm234, %v852, 0
      %871 = vmatprep.subr.mxu0 0.0
      %872 = vmatpush1.msra.mxu0 0.0
      %873 = vmatprep.subr.mxu0 0.0
      %874 = vmatpush1.msra.mxu0 0.0
      %875 = vmatprep.subr.mxu0 0.0
      %876 = vmatpush1.msra.mxu0 0.0
      %877 = vmatprep.subr.mxu0 0.0
      %878 = vmatpush1.msra.mxu0 0.0
      %879 = vmatprep.subr.mxu0 0.0
      %880 = vmatpush1.msra.mxu0 0.0
      %881 = vmatprep.subr.mxu0 0.0
      %882 = vmatpush1.msra.mxu0 0.0
      %883 = vmatprep.subr.mxu0 0.0
      %884 = vmatpush1.msra.mxu0 0.0
      %885 = vmatprep.subr.mxu0 0.0
      %886 = vmatpush1.msra.mxu0 0.0
      %887 = vmatprep.subr.mxu0 0.0
      %888 = vmatpush1.msra.mxu0 0.0
      %889 = vmatprep.subr.mxu0 0.0
      %890 = vmatpush1.msra.mxu0 0.0
      %891 = vmatprep.subr.mxu0 0.0
      %892 = vmatpush1.msra.mxu0 0.0
      %893 = vmatprep.subr.mxu0 0.0
      %894 = vmatpush1.msra.mxu0 0.0
      %895 = vmatprep.subr.mxu0 0.0
      %896 = vmatpush1.msra.mxu0 0.0
      %897 = vmatprep.subr.mxu0 0.0
      %898 = vmatpush1.msra.mxu0 0.0
      %899 = vmatprep.subr.mxu0 0.0
      %900 = vmatpush1.msra.mxu0 0.0
      %901 = vmatprep.subr.mxu0 %v863
      %902 = vmatpush1.msra.mxu0 %v862
      %903 = vmatprep.subr.mxu0 0.0
      %904 = vmatpush2.msra.mxu0 0.0
      %905 = vmatprep.subr.mxu0 0.0
      %906 = vmatpush2.msra.mxu0 0.0
      %907 = vmatprep.subr.mxu0 0.0
      %908 = vmatpush2.msra.mxu0 0.0
      %909 = vmatprep.subr.mxu0 0.0
      %910 = vmatpush2.msra.mxu0 0.0
      %911 = vmatprep.subr.mxu0 0.0
      %912 = vmatpush2.msra.mxu0 0.0
      %913 = vmatprep.subr.mxu0 0.0
      %914 = vmatpush2.msra.mxu0 0.0
      %915 = vmatprep.subr.mxu0 0.0
      %916 = vmatpush2.msra.mxu0 0.0
      %917 = vmatprep.subr.mxu0 0.0
      %918 = vmatpush2.msra.mxu0 0.0
      %919 = vmatprep.subr.mxu0 0.0
      %920 = vmatpush2.msra.mxu0 0.0
      %921 = vmatprep.subr.mxu0 0.0
      %922 = vmatpush2.msra.mxu0 0.0
      %923 = vmatprep.subr.mxu0 0.0
      %924 = vmatpush2.msra.mxu0 0.0
      %925 = vmatprep.subr.mxu0 0.0
      %926 = vmatpush2.msra.mxu0 0.0
      %927 = vmatprep.subr.mxu0 0.0
      %928 = vmatpush2.msra.mxu0 0.0
      %929 = vmatprep.subr.mxu0 0.0
      %930 = vmatpush2.msra.mxu0 0.0
      %931 = vmatprep.subr.mxu0 0.0
      %932 = vmatpush2.msra.mxu0 0.0
      %933 = vmatprep.subr.mxu0 0.0
      %934 = vmatpush2.msra.mxu0 0.0
      %935 = vmatprep.mubr.f32.mxu0 0.0
      %936 = vmatmul.mubr.f32.gmra.mxu0 %v869
      %v937 = vpop.f32.mrf.mxu0
      %v938 = vadd.f32 0.0, %v937
      %v939 = vpop.f32.mrf.mxu0
      %v940 = vadd.f32 0.0, %v939
      %941 = vdwg.mxu0
      %942 = vmatprep.subr.mxu0 0.0
      %943 = vmatpush1.msra.mxu0 0.0
      %944 = vmatprep.subr.mxu0 0.0
      %945 = vmatpush1.msra.mxu0 0.0
      %946 = vmatprep.subr.mxu0 0.0
      %947 = vmatpush1.msra.mxu0 0.0
      %948 = vmatprep.subr.mxu0 0.0
      %949 = vmatpush1.msra.mxu0 0.0
      %950 = vmatprep.subr.mxu0 0.0
      %951 = vmatpush1.msra.mxu0 0.0
      %952 = vmatprep.subr.mxu0 0.0
      %953 = vmatpush1.msra.mxu0 0.0
      %954 = vmatprep.subr.mxu0 0.0
      %955 = vmatpush1.msra.mxu0 0.0
      %956 = vmatprep.subr.mxu0 0.0
      %957 = vmatpush1.msra.mxu0 0.0
      %958 = vmatprep.subr.mxu0 0.0
      %959 = vmatpush1.msra.mxu0 0.0
      %960 = vmatprep.subr.mxu0 0.0
      %961 = vmatpush1.msra.mxu0 0.0
      %962 = vmatprep.subr.mxu0 0.0
      %963 = vmatpush1.msra.mxu0 0.0
      %964 = vmatprep.subr.mxu0 0.0
      %965 = vmatpush1.msra.mxu0 0.0
      %966 = vmatprep.subr.mxu0 0.0
      %967 = vmatpush1.msra.mxu0 0.0
      %968 = vmatprep.subr.mxu0 0.0
      %969 = vmatpush1.msra.mxu0 0.0
      %970 = vmatprep.subr.mxu0 0.0
      %971 = vmatpush1.msra.mxu0 0.0
      %972 = vmatprep.subr.mxu0 0.0
      %973 = vmatpush1.msra.mxu0 %v864
      %974 = vmatprep.subr.mxu0 0.0
      %975 = vmatpush2.msra.mxu0 0.0
      %976 = vmatprep.subr.mxu0 0.0
      %977 = vmatpush2.msra.mxu0 0.0
      %978 = vmatprep.subr.mxu0 0.0
      %979 = vmatpush2.msra.mxu0 0.0
      %980 = vmatprep.subr.mxu0 0.0
      %981 = vmatpush2.msra.mxu0 0.0
      %982 = vmatprep.subr.mxu0 0.0
      %983 = vmatpush2.msra.mxu0 0.0
      %984 = vmatprep.subr.mxu0 0.0
      %985 = vmatpush2.msra.mxu0 0.0
      %986 = vmatprep.subr.mxu0 0.0
      %987 = vmatpush2.msra.mxu0 0.0
      %988 = vmatprep.subr.mxu0 0.0
      %989 = vmatpush2.msra.mxu0 0.0
      %990 = vmatprep.subr.mxu0 0.0
      %991 = vmatpush2.msra.mxu0 0.0
      %992 = vmatprep.subr.mxu0 0.0
      %993 = vmatpush2.msra.mxu0 0.0
      %994 = vmatprep.subr.mxu0 0.0
      %995 = vmatpush2.msra.mxu0 0.0
      %996 = vmatprep.subr.mxu0 0.0
      %997 = vmatpush2.msra.mxu0 0.0
      %998 = vmatprep.subr.mxu0 0.0
      %999 = vmatpush2.msra.mxu0 0.0
      %1000 = vmatprep.subr.mxu0 0.0
      %1001 = vmatpush2.msra.mxu0 0.0
      %1002 = vmatprep.subr.mxu0 0.0
      %1003 = vmatpush2.msra.mxu0 0.0
      %1004 = vmatprep.subr.mxu0 0.0
      %1005 = vmatpush2.msra.mxu0 0.0
      %1006 = vmatprep.mubr.f32.mxu0 0.0
      %1007 = vmatmul.mubr.f32.gmra.mxu0 %v869
      %v1008 = vpop.f32.mrf.mxu0
      %v1009 = vadd.f32 0.0, %v1008
      %v1010 = vpop.f32.mrf.mxu0
      %1011 = vdwg.mxu0
      %v1012 = vadd.f32 %v848, %v938
      %v1013 = vadd.f32 %v849, %v940
      %v1014 = vadd.f32 %v850, %v1009
      %s1015 = scalar_lea.vmem %s1, 40
      %v1016 = vld [vmem:[%s1015] sm:$0xff]
      %1017 = vrot.lane.b32.xlu0 %v208, 108
      %v1018 = vpop.permute.xlu0 %1017
      %1019 = vrot.lane.b32.xlu0 %v209, 108
      %v1020 = vpop.permute.xlu0 %1019
      %1021 = vrot.lane.b32.xlu0 %v210, 108
      %v1022 = vpop.permute.xlu0 %1021
      %1023 = vrot.lane.b32.xlu0 %v211, 108
      %v1024 = vpop.permute.xlu0 %1023
      %vm1025 = vcmask 883712
      %v1026 = vsel %vm1025, %v1018, %v1020
      %v1027 = vsel %vm1025, %v1020, %v1022
      %v1028 = vsel %vm1025, %v1022, %v1024
      %v1033 = vsel %vm234, %v1016, 0
      %1035 = vmatprep.subr.mxu0 0.0
      %1036 = vmatpush1.msra.mxu0 0.0
      %1037 = vmatprep.subr.mxu0 0.0
      %1038 = vmatpush1.msra.mxu0 0.0
      %1039 = vmatprep.subr.mxu0 0.0
      %1040 = vmatpush1.msra.mxu0 0.0
      %1041 = vmatprep.subr.mxu0 0.0
      %1042 = vmatpush1.msra.mxu0 0.0
      %1043 = vmatprep.subr.mxu0 0.0
      %1044 = vmatpush1.msra.mxu0 0.0
      %1045 = vmatprep.subr.mxu0 0.0
      %1046 = vmatpush1.msra.mxu0 0.0
      %1047 = vmatprep.subr.mxu0 0.0
      %1048 = vmatpush1.msra.mxu0 0.0
      %1049 = vmatprep.subr.mxu0 0.0
      %1050 = vmatpush1.msra.mxu0 0.0
      %1051 = vmatprep.subr.mxu0 0.0
      %1052 = vmatpush1.msra.mxu0 0.0
      %1053 = vmatprep.subr.mxu0 0.0
      %1054 = vmatpush1.msra.mxu0 0.0
      %1055 = vmatprep.subr.mxu0 0.0
      %1056 = vmatpush1.msra.mxu0 0.0
      %1057 = vmatprep.subr.mxu0 0.0
      %1058 = vmatpush1.msra.mxu0 0.0
      %1059 = vmatprep.subr.mxu0 0.0
      %1060 = vmatpush1.msra.mxu0 0.0
      %1061 = vmatprep.subr.mxu0 0.0
      %1062 = vmatpush1.msra.mxu0 0.0
      %1063 = vmatprep.subr.mxu0 0.0
      %1064 = vmatpush1.msra.mxu0 0.0
      %1065 = vmatprep.subr.mxu0 %v1027
      %1066 = vmatpush1.msra.mxu0 %v1026
      %1067 = vmatprep.subr.mxu0 0.0
      %1068 = vmatpush2.msra.mxu0 0.0
      %1069 = vmatprep.subr.mxu0 0.0
      %1070 = vmatpush2.msra.mxu0 0.0
      %1071 = vmatprep.subr.mxu0 0.0
      %1072 = vmatpush2.msra.mxu0 0.0
      %1073 = vmatprep.subr.mxu0 0.0
      %1074 = vmatpush2.msra.mxu0 0.0
      %1075 = vmatprep.subr.mxu0 0.0
      %1076 = vmatpush2.msra.mxu0 0.0
      %1077 = vmatprep.subr.mxu0 0.0
      %1078 = vmatpush2.msra.mxu0 0.0
      %1079 = vmatprep.subr.mxu0 0.0
      %1080 = vmatpush2.msra.mxu0 0.0
      %1081 = vmatprep.subr.mxu0 0.0
      %1082 = vmatpush2.msra.mxu0 0.0
      %1083 = vmatprep.subr.mxu0 0.0
      %1084 = vmatpush2.msra.mxu0 0.0
      %1085 = vmatprep.subr.mxu0 0.0
      %1086 = vmatpush2.msra.mxu0 0.0
      %1087 = vmatprep.subr.mxu0 0.0
      %1088 = vmatpush2.msra.mxu0 0.0
      %1089 = vmatprep.subr.mxu0 0.0
      %1090 = vmatpush2.msra.mxu0 0.0
      %1091 = vmatprep.subr.mxu0 0.0
      %1092 = vmatpush2.msra.mxu0 0.0
      %1093 = vmatprep.subr.mxu0 0.0
      %1094 = vmatpush2.msra.mxu0 0.0
      %1095 = vmatprep.subr.mxu0 0.0
      %1096 = vmatpush2.msra.mxu0 0.0
      %1097 = vmatprep.subr.mxu0 0.0
      %1098 = vmatpush2.msra.mxu0 0.0
      %1099 = vmatprep.mubr.f32.mxu0 0.0
      %1100 = vmatmul.mubr.f32.gmra.mxu0 %v1033
      %v1101 = vpop.f32.mrf.mxu0
      %v1102 = vadd.f32 0.0, %v1101
      %v1103 = vpop.f32.mrf.mxu0
      %v1104 = vadd.f32 0.0, %v1103
      %1105 = vdwg.mxu0
      %1106 = vmatprep.subr.mxu0 0.0
      %1107 = vmatpush1.msra.mxu0 0.0
      %1108 = vmatprep.subr.mxu0 0.0
      %1109 = vmatpush1.msra.mxu0 0.0
      %1110 = vmatprep.subr.mxu0 0.0
      %1111 = vmatpush1.msra.mxu0 0.0
      %1112 = vmatprep.subr.mxu0 0.0
      %1113 = vmatpush1.msra.mxu0 0.0
      %1114 = vmatprep.subr.mxu0 0.0
      %1115 = vmatpush1.msra.mxu0 0.0
      %1116 = vmatprep.subr.mxu0 0.0
      %1117 = vmatpush1.msra.mxu0 0.0
      %1118 = vmatprep.subr.mxu0 0.0
      %1119 = vmatpush1.msra.mxu0 0.0
      %1120 = vmatprep.subr.mxu0 0.0
      %1121 = vmatpush1.msra.mxu0 0.0
      %1122 = vmatprep.subr.mxu0 0.0
      %1123 = vmatpush1.msra.mxu0 0.0
      %1124 = vmatprep.subr.mxu0 0.0
      %1125 = vmatpush1.msra.mxu0 0.0
      %1126 = vmatprep.subr.mxu0 0.0
      %1127 = vmatpush1.msra.mxu0 0.0
      %1128 = vmatprep.subr.mxu0 0.0
      %1129 = vmatpush1.msra.mxu0 0.0
      %1130 = vmatprep.subr.mxu0 0.0
      %1131 = vmatpush1.msra.mxu0 0.0
      %1132 = vmatprep.subr.mxu0 0.0
      %1133 = vmatpush1.msra.mxu0 0.0
      %1134 = vmatprep.subr.mxu0 0.0
      %1135 = vmatpush1.msra.mxu0 0.0
      %1136 = vmatprep.subr.mxu0 0.0
      %1137 = vmatpush1.msra.mxu0 %v1028
      %1138 = vmatprep.subr.mxu0 0.0
      %1139 = vmatpush2.msra.mxu0 0.0
      %1140 = vmatprep.subr.mxu0 0.0
      %1141 = vmatpush2.msra.mxu0 0.0
      %1142 = vmatprep.subr.mxu0 0.0
      %1143 = vmatpush2.msra.mxu0 0.0
      %1144 = vmatprep.subr.mxu0 0.0
      %1145 = vmatpush2.msra.mxu0 0.0
      %1146 = vmatprep.subr.mxu0 0.0
      %1147 = vmatpush2.msra.mxu0 0.0
      %1148 = vmatprep.subr.mxu0 0.0
      %1149 = vmatpush2.msra.mxu0 0.0
      %1150 = vmatprep.subr.mxu0 0.0
      %1151 = vmatpush2.msra.mxu0 0.0
      %1152 = vmatprep.subr.mxu0 0.0
      %1153 = vmatpush2.msra.mxu0 0.0
      %1154 = vmatprep.subr.mxu0 0.0
      %1155 = vmatpush2.msra.mxu0 0.0
      %1156 = vmatprep.subr.mxu0 0.0
      %1157 = vmatpush2.msra.mxu0 0.0
      %1158 = vmatprep.subr.mxu0 0.0
      %1159 = vmatpush2.msra.mxu0 0.0
      %1160 = vmatprep.subr.mxu0 0.0
      %1161 = vmatpush2.msra.mxu0 0.0
      %1162 = vmatprep.subr.mxu0 0.0
      %1163 = vmatpush2.msra.mxu0 0.0
      %1164 = vmatprep.subr.mxu0 0.0
      %1165 = vmatpush2.msra.mxu0 0.0
      %1166 = vmatprep.subr.mxu0 0.0
      %1167 = vmatpush2.msra.mxu0 0.0
      %1168 = vmatprep.subr.mxu0 0.0
      %1169 = vmatpush2.msra.mxu0 0.0
      %1170 = vmatprep.mubr.f32.mxu0 0.0
      %1171 = vmatmul.mubr.f32.gmra.mxu0 %v1033
      %v1172 = vpop.f32.mrf.mxu0
      %v1173 = vadd.f32 0.0, %v1172
      %v1174 = vpop.f32.mrf.mxu0
      %1175 = vdwg.mxu0
      %v1176 = vadd.f32 %v1012, %v1102
      %v1177 = vadd.f32 %v1013, %v1104
      %v1178 = vadd.f32 %v1014, %v1173
      %s1179 = scalar_lea.vmem %s1, 48
      %v1180 = vld [vmem:[%s1179] sm:$0xff]
      %1181 = vrot.lane.b32.xlu0 %v208, 92
      %v1182 = vpop.permute.xlu0 %1181
      %1183 = vrot.lane.b32.xlu0 %v209, 92
      %v1184 = vpop.permute.xlu0 %1183
      %1185 = vrot.lane.b32.xlu0 %v210, 92
      %v1186 = vpop.permute.xlu0 %1185
      %1187 = vrot.lane.b32.xlu0 %v211, 92
      %v1188 = vpop.permute.xlu0 %1187
      %vm1189 = vcmask 752640
      %v1190 = vsel %vm1189, %v1182, %v1184
      %v1191 = vsel %vm1189, %v1184, %v1186
      %v1192 = vsel %vm1189, %v1186, %v1188
      %v1197 = vsel %vm234, %v1180, 0
      %1199 = vmatprep.subr.mxu0 0.0
      %1200 = vmatpush1.msra.mxu0 0.0
      %1201 = vmatprep.subr.mxu0 0.0
      %1202 = vmatpush1.msra.mxu0 0.0
      %1203 = vmatprep.subr.mxu0 0.0
      %1204 = vmatpush1.msra.mxu0 0.0
      %1205 = vmatprep.subr.mxu0 0.0
      %1206 = vmatpush1.msra.mxu0 0.0
      %1207 = vmatprep.subr.mxu0 0.0
      %1208 = vmatpush1.msra.mxu0 0.0
      %1209 = vmatprep.subr.mxu0 0.0
      %1210 = vmatpush1.msra.mxu0 0.0
      %1211 = vmatprep.subr.mxu0 0.0
      %1212 = vmatpush1.msra.mxu0 0.0
      %1213 = vmatprep.subr.mxu0 0.0
      %1214 = vmatpush1.msra.mxu0 0.0
      %1215 = vmatprep.subr.mxu0 0.0
      %1216 = vmatpush1.msra.mxu0 0.0
      %1217 = vmatprep.subr.mxu0 0.0
      %1218 = vmatpush1.msra.mxu0 0.0
      %1219 = vmatprep.subr.mxu0 0.0
      %1220 = vmatpush1.msra.mxu0 0.0
      %1221 = vmatprep.subr.mxu0 0.0
      %1222 = vmatpush1.msra.mxu0 0.0
      %1223 = vmatprep.subr.mxu0 0.0
      %1224 = vmatpush1.msra.mxu0 0.0
      %1225 = vmatprep.subr.mxu0 0.0
      %1226 = vmatpush1.msra.mxu0 0.0
      %1227 = vmatprep.subr.mxu0 0.0
      %1228 = vmatpush1.msra.mxu0 0.0
      %1229 = vmatprep.subr.mxu0 %v1191
      %1230 = vmatpush1.msra.mxu0 %v1190
      %1231 = vmatprep.subr.mxu0 0.0
      %1232 = vmatpush2.msra.mxu0 0.0
      %1233 = vmatprep.subr.mxu0 0.0
      %1234 = vmatpush2.msra.mxu0 0.0
      %1235 = vmatprep.subr.mxu0 0.0
      %1236 = vmatpush2.msra.mxu0 0.0
      %1237 = vmatprep.subr.mxu0 0.0
      %1238 = vmatpush2.msra.mxu0 0.0
      %1239 = vmatprep.subr.mxu0 0.0
      %1240 = vmatpush2.msra.mxu0 0.0
      %1241 = vmatprep.subr.mxu0 0.0
      %1242 = vmatpush2.msra.mxu0 0.0
      %1243 = vmatprep.subr.mxu0 0.0
      %1244 = vmatpush2.msra.mxu0 0.0
      %1245 = vmatprep.subr.mxu0 0.0
      %1246 = vmatpush2.msra.mxu0 0.0
      %1247 = vmatprep.subr.mxu0 0.0
      %1248 = vmatpush2.msra.mxu0 0.0
      %1249 = vmatprep.subr.mxu0 0.0
      %1250 = vmatpush2.msra.mxu0 0.0
      %1251 = vmatprep.subr.mxu0 0.0
      %1252 = vmatpush2.msra.mxu0 0.0
      %1253 = vmatprep.subr.mxu0 0.0
      %1254 = vmatpush2.msra.mxu0 0.0
      %1255 = vmatprep.subr.mxu0 0.0
      %1256 = vmatpush2.msra.mxu0 0.0
      %1257 = vmatprep.subr.mxu0 0.0
      %1258 = vmatpush2.msra.mxu0 0.0
      %1259 = vmatprep.subr.mxu0 0.0
      %1260 = vmatpush2.msra.mxu0 0.0
      %1261 = vmatprep.subr.mxu0 0.0
      %1262 = vmatpush2.msra.mxu0 0.0
      %1263 = vmatprep.mubr.f32.mxu0 0.0
      %1264 = vmatmul.mubr.f32.gmra.mxu0 %v1197
      %v1265 = vpop.f32.mrf.mxu0
      %v1266 = vadd.f32 0.0, %v1265
      %v1267 = vpop.f32.mrf.mxu0
      %v1268 = vadd.f32 0.0, %v1267
      %1269 = vdwg.mxu0
      %1270 = vmatprep.subr.mxu0 0.0
      %1271 = vmatpush1.msra.mxu0 0.0
      %1272 = vmatprep.subr.mxu0 0.0
      %1273 = vmatpush1.msra.mxu0 0.0
      %1274 = vmatprep.subr.mxu0 0.0
      %1275 = vmatpush1.msra.mxu0 0.0
      %1276 = vmatprep.subr.mxu0 0.0
      %1277 = vmatpush1.msra.mxu0 0.0
      %1278 = vmatprep.subr.mxu0 0.0
      %1279 = vmatpush1.msra.mxu0 0.0
      %1280 = vmatprep.subr.mxu0 0.0
      %1281 = vmatpush1.msra.mxu0 0.0
      %1282 = vmatprep.subr.mxu0 0.0
      %1283 = vmatpush1.msra.mxu0 0.0
      %1284 = vmatprep.subr.mxu0 0.0
      %1285 = vmatpush1.msra.mxu0 0.0
      %1286 = vmatprep.subr.mxu0 0.0
      %1287 = vmatpush1.msra.mxu0 0.0
      %1288 = vmatprep.subr.mxu0 0.0
      %1289 = vmatpush1.msra.mxu0 0.0
      %1290 = vmatprep.subr.mxu0 0.0
      %1291 = vmatpush1.msra.mxu0 0.0
      %1292 = vmatprep.subr.mxu0 0.0
      %1293 = vmatpush1.msra.mxu0 0.0
      %1294 = vmatprep.subr.mxu0 0.0
      %1295 = vmatpush1.msra.mxu0 0.0
      %1296 = vmatprep.subr.mxu0 0.0
      %1297 = vmatpush1.msra.mxu0 0.0
      %1298 = vmatprep.subr.mxu0 0.0
      %1299 = vmatpush1.msra.mxu0 0.0
      %1300 = vmatprep.subr.mxu0 0.0
      %1301 = vmatpush1.msra.mxu0 %v1192
      %1302 = vmatprep.subr.mxu0 0.0
      %1303 = vmatpush2.msra.mxu0 0.0
      %1304 = vmatprep.subr.mxu0 0.0
      %1305 = vmatpush2.msra.mxu0 0.0
      %1306 = vmatprep.subr.mxu0 0.0
      %1307 = vmatpush2.msra.mxu0 0.0
      %1308 = vmatprep.subr.mxu0 0.0
      %1309 = vmatpush2.msra.mxu0 0.0
      %1310 = vmatprep.subr.mxu0 0.0
      %1311 = vmatpush2.msra.mxu0 0.0
      %1312 = vmatprep.subr.mxu0 0.0
      %1313 = vmatpush2.msra.mxu0 0.0
      %1314 = vmatprep.subr.mxu0 0.0
      %1315 = vmatpush2.msra.mxu0 0.0
      %1316 = vmatprep.subr.mxu0 0.0
      %1317 = vmatpush2.msra.mxu0 0.0
      %1318 = vmatprep.subr.mxu0 0.0
      %1319 = vmatpush2.msra.mxu0 0.0
      %1320 = vmatprep.subr.mxu0 0.0
      %1321 = vmatpush2.msra.mxu0 0.0
      %1322 = vmatprep.subr.mxu0 0.0
      %1323 = vmatpush2.msra.mxu0 0.0
      %1324 = vmatprep.subr.mxu0 0.0
      %1325 = vmatpush2.msra.mxu0 0.0
      %1326 = vmatprep.subr.mxu0 0.0
      %1327 = vmatpush2.msra.mxu0 0.0
      %1328 = vmatprep.subr.mxu0 0.0
      %1329 = vmatpush2.msra.mxu0 0.0
      %1330 = vmatprep.subr.mxu0 0.0
      %1331 = vmatpush2.msra.mxu0 0.0
      %1332 = vmatprep.subr.mxu0 0.0
      %1333 = vmatpush2.msra.mxu0 0.0
      %1334 = vmatprep.mubr.f32.mxu0 0.0
      %1335 = vmatmul.mubr.f32.gmra.mxu0 %v1197
      %v1336 = vpop.f32.mrf.mxu0
      %v1337 = vadd.f32 0.0, %v1336
      %v1338 = vpop.f32.mrf.mxu0
      %1339 = vdwg.mxu0
      %v1340 = vadd.f32 %v1176, %v1266
      %v1341 = vadd.f32 %v1177, %v1268
      %v1342 = vadd.f32 %v1178, %v1337
      %s1343 = scalar_lea.vmem %s1, 56
      %v1344 = vld [vmem:[%s1343] sm:$0xff]
      %1345 = vrot.lane.b32.xlu0 %v208, 91
      %v1346 = vpop.permute.xlu0 %1345
      %1347 = vrot.lane.b32.xlu0 %v209, 91
      %v1348 = vpop.permute.xlu0 %1347
      %1349 = vrot.lane.b32.xlu0 %v210, 91
      %v1350 = vpop.permute.xlu0 %1349
      %1351 = vrot.lane.b32.xlu0 %v211, 91
      %v1352 = vpop.permute.xlu0 %1351
      %vm1353 = vcmask 744448
      %v1354 = vsel %vm1353, %v1346, %v1348
      %v1355 = vsel %vm1353, %v1348, %v1350
      %v1356 = vsel %vm1353, %v1350, %v1352
      %v1361 = vsel %vm234, %v1344, 0
      %1363 = vmatprep.subr.mxu0 0.0
      %1364 = vmatpush1.msra.mxu0 0.0
      %1365 = vmatprep.subr.mxu0 0.0
      %1366 = vmatpush1.msra.mxu0 0.0
      %1367 = vmatprep.subr.mxu0 0.0
      %1368 = vmatpush1.msra.mxu0 0.0
      %1369 = vmatprep.subr.mxu0 0.0
      %1370 = vmatpush1.msra.mxu0 0.0
      %1371 = vmatprep.subr.mxu0 0.0
      %1372 = vmatpush1.msra.mxu0 0.0
      %1373 = vmatprep.subr.mxu0 0.0
      %1374 = vmatpush1.msra.mxu0 0.0
      %1375 = vmatprep.subr.mxu0 0.0
      %1376 = vmatpush1.msra.mxu0 0.0
      %1377 = vmatprep.subr.mxu0 0.0
      %1378 = vmatpush1.msra.mxu0 0.0
      %1379 = vmatprep.subr.mxu0 0.0
      %1380 = vmatpush1.msra.mxu0 0.0
      %1381 = vmatprep.subr.mxu0 0.0
      %1382 = vmatpush1.msra.mxu0 0.0
      %1383 = vmatprep.subr.mxu0 0.0
      %1384 = vmatpush1.msra.mxu0 0.0
      %1385 = vmatprep.subr.mxu0 0.0
      %1386 = vmatpush1.msra.mxu0 0.0
      %1387 = vmatprep.subr.mxu0 0.0
      %1388 = vmatpush1.msra.mxu0 0.0
      %1389 = vmatprep.subr.mxu0 0.0
      %1390 = vmatpush1.msra.mxu0 0.0
      %1391 = vmatprep.subr.mxu0 0.0
      %1392 = vmatpush1.msra.mxu0 0.0
      %1393 = vmatprep.subr.mxu0 %v1355
      %1394 = vmatpush1.msra.mxu0 %v1354
      %1395 = vmatprep.subr.mxu0 0.0
      %1396 = vmatpush2.msra.mxu0 0.0
      %1397 = vmatprep.subr.mxu0 0.0
      %1398 = vmatpush2.msra.mxu0 0.0
      %1399 = vmatprep.subr.mxu0 0.0
      %1400 = vmatpush2.msra.mxu0 0.0
      %1401 = vmatprep.subr.mxu0 0.0
      %1402 = vmatpush2.msra.mxu0 0.0
      %1403 = vmatprep.subr.mxu0 0.0
      %1404 = vmatpush2.msra.mxu0 0.0
      %1405 = vmatprep.subr.mxu0 0.0
      %1406 = vmatpush2.msra.mxu0 0.0
      %1407 = vmatprep.subr.mxu0 0.0
      %1408 = vmatpush2.msra.mxu0 0.0
      %1409 = vmatprep.subr.mxu0 0.0
      %1410 = vmatpush2.msra.mxu0 0.0
      %1411 = vmatprep.subr.mxu0 0.0
      %1412 = vmatpush2.msra.mxu0 0.0
      %1413 = vmatprep.subr.mxu0 0.0
      %1414 = vmatpush2.msra.mxu0 0.0
      %1415 = vmatprep.subr.mxu0 0.0
      %1416 = vmatpush2.msra.mxu0 0.0
      %1417 = vmatprep.subr.mxu0 0.0
      %1418 = vmatpush2.msra.mxu0 0.0
      %1419 = vmatprep.subr.mxu0 0.0
      %1420 = vmatpush2.msra.mxu0 0.0
      %1421 = vmatprep.subr.mxu0 0.0
      %1422 = vmatpush2.msra.mxu0 0.0
      %1423 = vmatprep.subr.mxu0 0.0
      %1424 = vmatpush2.msra.mxu0 0.0
      %1425 = vmatprep.subr.mxu0 0.0
      %1426 = vmatpush2.msra.mxu0 0.0
      %1427 = vmatprep.mubr.f32.mxu0 0.0
      %1428 = vmatmul.mubr.f32.gmra.mxu0 %v1361
      %v1429 = vpop.f32.mrf.mxu0
      %v1430 = vadd.f32 0.0, %v1429
      %v1431 = vpop.f32.mrf.mxu0
      %v1432 = vadd.f32 0.0, %v1431
      %1433 = vdwg.mxu0
      %1434 = vmatprep.subr.mxu0 0.0
      %1435 = vmatpush1.msra.mxu0 0.0
      %1436 = vmatprep.subr.mxu0 0.0
      %1437 = vmatpush1.msra.mxu0 0.0
      %1438 = vmatprep.subr.mxu0 0.0
      %1439 = vmatpush1.msra.mxu0 0.0
      %1440 = vmatprep.subr.mxu0 0.0
      %1441 = vmatpush1.msra.mxu0 0.0
      %1442 = vmatprep.subr.mxu0 0.0
      %1443 = vmatpush1.msra.mxu0 0.0
      %1444 = vmatprep.subr.mxu0 0.0
      %1445 = vmatpush1.msra.mxu0 0.0
      %1446 = vmatprep.subr.mxu0 0.0
      %1447 = vmatpush1.msra.mxu0 0.0
      %1448 = vmatprep.subr.mxu0 0.0
      %1449 = vmatpush1.msra.mxu0 0.0
      %1450 = vmatprep.subr.mxu0 0.0
      %1451 = vmatpush1.msra.mxu0 0.0
      %1452 = vmatprep.subr.mxu0 0.0
      %1453 = vmatpush1.msra.mxu0 0.0
      %1454 = vmatprep.subr.mxu0 0.0
      %1455 = vmatpush1.msra.mxu0 0.0
      %1456 = vmatprep.subr.mxu0 0.0
      %1457 = vmatpush1.msra.mxu0 0.0
      %1458 = vmatprep.subr.mxu0 0.0
      %1459 = vmatpush1.msra.mxu0 0.0
      %1460 = vmatprep.subr.mxu0 0.0
      %1461 = vmatpush1.msra.mxu0 0.0
      %1462 = vmatprep.subr.mxu0 0.0
      %1463 = vmatpush1.msra.mxu0 0.0
      %1464 = vmatprep.subr.mxu0 0.0
      %1465 = vmatpush1.msra.mxu0 %v1356
      %1466 = vmatprep.subr.mxu0 0.0
      %1467 = vmatpush2.msra.mxu0 0.0
      %1468 = vmatprep.subr.mxu0 0.0
      %1469 = vmatpush2.msra.mxu0 0.0
      %1470 = vmatprep.subr.mxu0 0.0
      %1471 = vmatpush2.msra.mxu0 0.0
      %1472 = vmatprep.subr.mxu0 0.0
      %1473 = vmatpush2.msra.mxu0 0.0
      %1474 = vmatprep.subr.mxu0 0.0
      %1475 = vmatpush2.msra.mxu0 0.0
      %1476 = vmatprep.subr.mxu0 0.0
      %1477 = vmatpush2.msra.mxu0 0.0
      %1478 = vmatprep.subr.mxu0 0.0
      %1479 = vmatpush2.msra.mxu0 0.0
      %1480 = vmatprep.subr.mxu0 0.0
      %1481 = vmatpush2.msra.mxu0 0.0
      %1482 = vmatprep.subr.mxu0 0.0
      %1483 = vmatpush2.msra.mxu0 0.0
      %1484 = vmatprep.subr.mxu0 0.0
      %1485 = vmatpush2.msra.mxu0 0.0
      %1486 = vmatprep.subr.mxu0 0.0
      %1487 = vmatpush2.msra.mxu0 0.0
      %1488 = vmatprep.subr.mxu0 0.0
      %1489 = vmatpush2.msra.mxu0 0.0
      %1490 = vmatprep.subr.mxu0 0.0
      %1491 = vmatpush2.msra.mxu0 0.0
      %1492 = vmatprep.subr.mxu0 0.0
      %1493 = vmatpush2.msra.mxu0 0.0
      %1494 = vmatprep.subr.mxu0 0.0
      %1495 = vmatpush2.msra.mxu0 0.0
      %1496 = vmatprep.subr.mxu0 0.0
      %1497 = vmatpush2.msra.mxu0 0.0
      %1498 = vmatprep.mubr.f32.mxu0 0.0
      %1499 = vmatmul.mubr.f32.gmra.mxu0 %v1361
      %v1500 = vpop.f32.mrf.mxu0
      %v1501 = vadd.f32 0.0, %v1500
      %v1502 = vpop.f32.mrf.mxu0
      %1503 = vdwg.mxu0
      %v1504 = vadd.f32 %v1340, %v1430
      %v1505 = vadd.f32 %v1341, %v1432
      %v1506 = vadd.f32 %v1342, %v1501
      %s1507 = scalar_lea.vmem %s1, 64
      %v1508 = vld [vmem:[%s1507] sm:$0xff]
      %1509 = vrot.lane.b32.xlu0 %v208, 90
      %v1510 = vpop.permute.xlu0 %1509
      %1511 = vrot.lane.b32.xlu0 %v209, 90
      %v1512 = vpop.permute.xlu0 %1511
      %1513 = vrot.lane.b32.xlu0 %v210, 90
      %v1514 = vpop.permute.xlu0 %1513
      %1515 = vrot.lane.b32.xlu0 %v211, 90
      %v1516 = vpop.permute.xlu0 %1515
      %vm1517 = vcmask 736256
      %v1518 = vsel %vm1517, %v1510, %v1512
      %v1519 = vsel %vm1517, %v1512, %v1514
      %v1520 = vsel %vm1517, %v1514, %v1516
      %v1525 = vsel %vm234, %v1508, 0
      %1527 = vmatprep.subr.mxu0 0.0
      %1528 = vmatpush1.msra.mxu0 0.0
      %1529 = vmatprep.subr.mxu0 0.0
      %1530 = vmatpush1.msra.mxu0 0.0
      %1531 = vmatprep.subr.mxu0 0.0
      %1532 = vmatpush1.msra.mxu0 0.0
      %1533 = vmatprep.subr.mxu0 0.0
      %1534 = vmatpush1.msra.mxu0 0.0
      %1535 = vmatprep.subr.mxu0 0.0
      %1536 = vmatpush1.msra.mxu0 0.0
      %1537 = vmatprep.subr.mxu0 0.0
      %1538 = vmatpush1.msra.mxu0 0.0
      %1539 = vmatprep.subr.mxu0 0.0
      %1540 = vmatpush1.msra.mxu0 0.0
      %1541 = vmatprep.subr.mxu0 0.0
      %1542 = vmatpush1.msra.mxu0 0.0
      %1543 = vmatprep.subr.mxu0 0.0
      %1544 = vmatpush1.msra.mxu0 0.0
      %1545 = vmatprep.subr.mxu0 0.0
      %1546 = vmatpush1.msra.mxu0 0.0
      %1547 = vmatprep.subr.mxu0 0.0
      %1548 = vmatpush1.msra.mxu0 0.0
      %1549 = vmatprep.subr.mxu0 0.0
      %1550 = vmatpush1.msra.mxu0 0.0
      %1551 = vmatprep.subr.mxu0 0.0
      %1552 = vmatpush1.msra.mxu0 0.0
      %1553 = vmatprep.subr.mxu0 0.0
      %1554 = vmatpush1.msra.mxu0 0.0
      %1555 = vmatprep.subr.mxu0 0.0
      %1556 = vmatpush1.msra.mxu0 0.0
      %1557 = vmatprep.subr.mxu0 %v1519
      %1558 = vmatpush1.msra.mxu0 %v1518
      %1559 = vmatprep.subr.mxu0 0.0
      %1560 = vmatpush2.msra.mxu0 0.0
      %1561 = vmatprep.subr.mxu0 0.0
      %1562 = vmatpush2.msra.mxu0 0.0
      %1563 = vmatprep.subr.mxu0 0.0
      %1564 = vmatpush2.msra.mxu0 0.0
      %1565 = vmatprep.subr.mxu0 0.0
      %1566 = vmatpush2.msra.mxu0 0.0
      %1567 = vmatprep.subr.mxu0 0.0
      %1568 = vmatpush2.msra.mxu0 0.0
      %1569 = vmatprep.subr.mxu0 0.0
      %1570 = vmatpush2.msra.mxu0 0.0
      %1571 = vmatprep.subr.mxu0 0.0
      %1572 = vmatpush2.msra.mxu0 0.0
      %1573 = vmatprep.subr.mxu0 0.0
      %1574 = vmatpush2.msra.mxu0 0.0
      %1575 = vmatprep.subr.mxu0 0.0
      %1576 = vmatpush2.msra.mxu0 0.0
      %1577 = vmatprep.subr.mxu0 0.0
      %1578 = vmatpush2.msra.mxu0 0.0
      %1579 = vmatprep.subr.mxu0 0.0
      %1580 = vmatpush2.msra.mxu0 0.0
      %1581 = vmatprep.subr.mxu0 0.0
      %1582 = vmatpush2.msra.mxu0 0.0
      %1583 = vmatprep.subr.mxu0 0.0
      %1584 = vmatpush2.msra.mxu0 0.0
      %1585 = vmatprep.subr.mxu0 0.0
      %1586 = vmatpush2.msra.mxu0 0.0
      %1587 = vmatprep.subr.mxu0 0.0
      %1588 = vmatpush2.msra.mxu0 0.0
      %1589 = vmatprep.subr.mxu0 0.0
      %1590 = vmatpush2.msra.mxu0 0.0
      %1591 = vmatprep.mubr.f32.mxu0 0.0
      %1592 = vmatmul.mubr.f32.gmra.mxu0 %v1525
      %v1593 = vpop.f32.mrf.mxu0
      %v1594 = vadd.f32 0.0, %v1593
      %v1595 = vpop.f32.mrf.mxu0
      %v1596 = vadd.f32 0.0, %v1595
      %1597 = vdwg.mxu0
      %1598 = vmatprep.subr.mxu0 0.0
      %1599 = vmatpush1.msra.mxu0 0.0
      %1600 = vmatprep.subr.mxu0 0.0
      %1601 = vmatpush1.msra.mxu0 0.0
      %1602 = vmatprep.subr.mxu0 0.0
      %1603 = vmatpush1.msra.mxu0 0.0
      %1604 = vmatprep.subr.mxu0 0.0
      %1605 = vmatpush1.msra.mxu0 0.0
      %1606 = vmatprep.subr.mxu0 0.0
      %1607 = vmatpush1.msra.mxu0 0.0
      %1608 = vmatprep.subr.mxu0 0.0
      %1609 = vmatpush1.msra.mxu0 0.0
      %1610 = vmatprep.subr.mxu0 0.0
      %1611 = vmatpush1.msra.mxu0 0.0
      %1612 = vmatprep.subr.mxu0 0.0
      %1613 = vmatpush1.msra.mxu0 0.0
      %1614 = vmatprep.subr.mxu0 0.0
      %1615 = vmatpush1.msra.mxu0 0.0
      %1616 = vmatprep.subr.mxu0 0.0
      %1617 = vmatpush1.msra.mxu0 0.0
      %1618 = vmatprep.subr.mxu0 0.0
      %1619 = vmatpush1.msra.mxu0 0.0
      %1620 = vmatprep.subr.mxu0 0.0
      %1621 = vmatpush1.msra.mxu0 0.0
      %1622 = vmatprep.subr.mxu0 0.0
      %1623 = vmatpush1.msra.mxu0 0.0
      %1624 = vmatprep.subr.mxu0 0.0
      %1625 = vmatpush1.msra.mxu0 0.0
      %1626 = vmatprep.subr.mxu0 0.0
      %1627 = vmatpush1.msra.mxu0 0.0
      %1628 = vmatprep.subr.mxu0 0.0
      %1629 = vmatpush1.msra.mxu0 %v1520
      %1630 = vmatprep.subr.mxu0 0.0
      %1631 = vmatpush2.msra.mxu0 0.0
      %1632 = vmatprep.subr.mxu0 0.0
      %1633 = vmatpush2.msra.mxu0 0.0
      %1634 = vmatprep.subr.mxu0 0.0
      %1635 = vmatpush2.msra.mxu0 0.0
      %1636 = vmatprep.subr.mxu0 0.0
      %1637 = vmatpush2.msra.mxu0 0.0
      %1638 = vmatprep.subr.mxu0 0.0
      %1639 = vmatpush2.msra.mxu0 0.0
      %1640 = vmatprep.subr.mxu0 0.0
      %1641 = vmatpush2.msra.mxu0 0.0
      %1642 = vmatprep.subr.mxu0 0.0
      %1643 = vmatpush2.msra.mxu0 0.0
      %1644 = vmatprep.subr.mxu0 0.0
      %1645 = vmatpush2.msra.mxu0 0.0
      %1646 = vmatprep.subr.mxu0 0.0
      %1647 = vmatpush2.msra.mxu0 0.0
      %1648 = vmatprep.subr.mxu0 0.0
      %1649 = vmatpush2.msra.mxu0 0.0
      %1650 = vmatprep.subr.mxu0 0.0
      %1651 = vmatpush2.msra.mxu0 0.0
      %1652 = vmatprep.subr.mxu0 0.0
      %1653 = vmatpush2.msra.mxu0 0.0
      %1654 = vmatprep.subr.mxu0 0.0
      %1655 = vmatpush2.msra.mxu0 0.0
      %1656 = vmatprep.subr.mxu0 0.0
      %1657 = vmatpush2.msra.mxu0 0.0
      %1658 = vmatprep.subr.mxu0 0.0
      %1659 = vmatpush2.msra.mxu0 0.0
      %1660 = vmatprep.subr.mxu0 0.0
      %1661 = vmatpush2.msra.mxu0 0.0
      %1662 = vmatprep.mubr.f32.mxu0 0.0
      %1663 = vmatmul.mubr.f32.gmra.mxu0 %v1525
      %v1664 = vpop.f32.mrf.mxu0
      %v1665 = vadd.f32 0.0, %v1664
      %v1666 = vpop.f32.mrf.mxu0
      %1667 = vdwg.mxu0
      %v1668 = vadd.f32 %v1504, %v1594
      %v1669 = vadd.f32 %v1505, %v1596
      %v1670 = vadd.f32 %v1506, %v1665
      %v1672 = vlaneseq
      %v1673 = vshrl.u32 %v1672, 7
      %v1674 = vsub.s32 0, %v1673
      %v1675 = vrot.slane %v207, %v1674
      %v1676 = vlaneseq
      %v1677 = vshrl.u32 %v1676, 7
      %v1678 = vsub.s32 1, %v1677
      %v1679 = vrot.slane %v207, %v1678
      %v1680 = vlaneseq
      %v1681 = vshrl.u32 %v1680, 7
      %v1682 = vsub.s32 2, %v1681
      %v1683 = vrot.slane %v207, %v1682
      %v1687 = vmul.f32 %v1668, %v1675
      %v1688 = vmul.f32 %v1669, %v1679
      %v1689 = vmul.f32 %v1670, %v1683
      %v1690 = vadd.f32 %v1687, %v1688
      %v1691 = vadd.f32 %v1690, %v1689
      %1692 = vadd.xlane.f32.xlu0 %v1691
      %v1693 = vpop.xlane.xlu0 %1692
      %v1694 = vadd.f32 %v1693, 0.0
      %v1695 = vmul.f32 %v1687, %v1668
      %v1696 = vmul.f32 %v1688, %v1669
      %v1697 = vmul.f32 %v1689, %v1670
      %v1698 = vadd.f32 %v1695, %v1696
      %v1699 = vadd.f32 %v1698, %v1697
      %1700 = vadd.xlane.f32.xlu0 %v1699
      %v1701 = vpop.xlane.xlu0 %1700
      %v1702 = vadd.f32 %v1701, 0.0
      %vm1703 = vcmask 7168
      %1704 = vst.msk [vmem:[%s202] sm:$0xff] %vm1703, %v1694
      %1705 = vst.msk [vmem:[%s206] sm:$0xff] %vm1703, %v1702
      %p1706 = scmp.lt.s32.totalorder %s16, 1
      %s1707 = scalar_select %p1706, %s16, 1
      %s1708 = smul.addr %s1707, 8
      %s1709 = scalar_lea.vmem %s3, %s1708
      %p1710 = scmp.lt.s32.totalorder %s16, 1
      %s1711 = scalar_select %p1710, %s16, 1
      %s1712 = smul.addr %s1711, 8
      %s1713 = scalar_lea.vmem %s4, %s1712
      // Predicated region
      $region33: #{tpu_custom_call.1} parent=31 // pred_check
        %p1714 = pneg %p102
      $region34: #{tpu_custom_call.1} parent=31 // pred_check_branch
        %1716 = sbr.rel (%p1714) target = $region36
      $region35: #{tpu_custom_call.1} parent=31 // pred_region
        _
      $region36: #{tpu_custom_call.1} parent=31 // pred_fallthru
        _
      // Predicated region
      $region37: #{tpu_custom_call.1} parent=31 // pred_check
        %p1717 = pneg %p128
      $region38: #{tpu_custom_call.1} parent=31 // pred_check_branch
        %1719 = sbr.rel (%p1717) target = $region40
      $region39: #{tpu_custom_call.1} parent=31 // pred_region
        _
      $region40: #{tpu_custom_call.1} parent=31 // pred_fallthru
        _
    $region32: #{tpu_custom_call.1} parent=5 // pred_fallthru
      _
    %p1720 = scmp.le.s32.totalorder 2, %s11
    // Predicated region
    $region41: #{tpu_custom_call.1} parent=5 // pred_check
      %p1721 = pneg %p1720
    $region42: #{tpu_custom_call.1} parent=5 // pred_check_branch
      %1723 = sbr.rel (%p1721) target = $region44
    $region43: #{tpu_custom_call.1} parent=5 // pred_region
      %s1724 = ssub.s32 %s11, 2
      // Predicated region
      $region45: #{tpu_custom_call.1} parent=43 // pred_check
        %p1725 = pneg %p108
      $region46: #{tpu_custom_call.1} parent=43 // pred_check_branch
        %1727 = sbr.rel (%p1725) target = $region48
      $region47: #{tpu_custom_call.1} parent=43 // pred_region
        %p1728 = scmp.lt.s32.totalorder %s17, 1
        %s1729 = scalar_select %p1728, %s17, 1
        %s1730 = smul.addr %s1729, 8
        %s1731 = scalar_lea.vmem %s3, %s1730
      $region48: #{tpu_custom_call.1} parent=43 // pred_fallthru
        _
      // Predicated region
      $region49: #{tpu_custom_call.1} parent=43 // pred_check
        %p1732 = pneg %p134
      $region50: #{tpu_custom_call.1} parent=43 // pred_check_branch
        %1734 = sbr.rel (%p1732) target = $region52
      $region51: #{tpu_custom_call.1} parent=43 // pred_region
        %p1735 = scmp.lt.s32.totalorder %s17, 1
        %s1736 = scalar_select %p1735, %s17, 1
        %s1737 = smul.addr %s1736, 8
        %s1738 = scalar_lea.vmem %s4, %s1737
      $region52: #{tpu_custom_call.1} parent=43 // pred_fallthru
        _
    $region44: #{tpu_custom_call.1} parent=5 // pred_fallthru
      _
  $region6: #{tpu_custom_call.1} parent=0 // loop_footer
    %s15 = sadd.s32 1, %s11
  $region7: #{tpu_custom_call.1} parent=0 // loop_footer_branch
    %10 = sbr.rel target = $region3
  $region8: #{tpu_custom_call.1} parent=0 // loop_exit
    _

</llo_original>
